<compile_context>
chip_gen: v7x
topology: tpu7x:2x2x1
jax: 0.10.0
libtpu: 0.0.40
codegen_flags: <defaults>
</compile_context>

<pallas_src>
import functools

import numpy as np

import jax
import jax.numpy as jnp
from jax.experimental import pallas as pl
from jax.experimental.pallas import tpu as pltpu


def _round_up(x, m):
    return ((x + m - 1) // m) * m


def _vmem_budget_bytes():
    """Generation-aware VMEM budget: ~85% of physical, with a safe fallback."""
    try:
        cap = pltpu.get_tpu_info().vmem_capacity_bytes
    except Exception:
        cap = 64 * 1024 * 1024          # assume the smallest part (v7x per-TC)
    return int(min(max(int(cap * 0.85), 32 * 1024 * 1024), 112 * 1024 * 1024))


def _vmem_need_bytes(th, Wk, Cp, Coutp, out_itemsize):
    """Rough per-grid-step VMEM estimate used to size the H tile."""
    slab = 2 * (th + 2) * (Wk + 2) * Cp * 2                # double-buffered bf16 input slab
    outb = 2 * th * Wk * Coutp * out_itemsize              # double-buffered output tile
    wts = 2 * (Cp * Coutp * 2 + 9 * Cp * 2 + Cp * 4 + Coutp * 4)
    temps = (3 * (th + 2) * Wk * Cp * 2                    # bf16 shifted column slices
             + 2 * th * Wk * Cp * 4                        # f32 accumulator + live cast temp
             + th * Wk * Cp * 2                            # bf16 matmul LHS
             + th * Wk * Coutp * 4)                        # f32 matmul result
    return slab + outb + wts + temps


def _pick_th(H, Wk, Cp, Coutp, out_itemsize, budget):
    th = H
    while th > 1 and _vmem_need_bytes(th, Wk, Cp, Coutp, out_itemsize) > budget:
        th = (th + 1) // 2
    return max(th, 1)


# ---------------------------------------------------------------------------
# Fused kernel: depthwise 3x3 (+bias) -> pointwise 1x1 (+bias), one H slab.
# ---------------------------------------------------------------------------
def _sepconv_kernel(xs_ref, dww_ref, dwb_ref, pww_ref, pwb_ref, o_ref, *, TH, Wk):
    """One (batch, H-tile) grid step.

    xs_ref  : (1, 1, TH+2, Wk+2, Cp) bf16  padded input slab (1-row halo)
    dww_ref : (9, Cp)                bf16  depthwise taps, tap-major   (resident)
    dwb_ref : (1, Cp)                f32   depthwise bias              (resident)
    pww_ref : (Cp, Coutp)            bf16  full pointwise weight       (resident)
    pwb_ref : (1, Coutp)             f32   pointwise bias              (resident)
    o_ref   : (1, 1, TH*Wk, Coutp)         flat, lane-dense output tile
    """
    Cp = xs_ref.shape[-1]

    # -- depthwise 3x3 + bias (VPU, f32 accumulation) -------------------------
    # 3 bf16 column-shifted slices of the ref (dx = 0,1,2); the 9 tap slices
    # then only shift along the leading H axis (free).  No f32 image copy.
    cols = [xs_ref[0, 0, :, dx:dx + Wk, :] for dx in range(3)]   # (TH+2, Wk, Cp) bf16
    acc = jnp.zeros((TH, Wk, Cp), jnp.float32)
    for ky in range(3):                                          # 9 static taps
        for kx in range(3):
            w_t = dww_ref[3 * ky + kx, :].astype(jnp.float32)    # (Cp,)
            acc = acc + cols[kx][ky:ky + TH, :, :].astype(jnp.float32) * w_t
    acc = acc + dwb_ref[...]                                     # (1, Cp) broadcast

    # -- pointwise 1x1 + bias on the MXU (bf16 x bf16 -> f32) ------------------
    dw = acc.reshape(TH * Wk, Cp).astype(jnp.bfloat16)           # Wk % 8 == 0: free reshape
    y = jnp.dot(dw, pww_ref[...], preferred_element_type=jnp.float32)
    y = y + pwb_ref[...]
    o_ref[...] = y.reshape((1, 1) + y.shape).astype(o_ref.dtype)


# ---------------------------------------------------------------------------
# Wrapper
# ---------------------------------------------------------------------------
def separable_conv2d_forward(x_nchw, params, out_dtype=jnp.float32):
    dw_w, dw_b = params["dw_w"], params["dw_b"]          # (9, Cin), (Cin,)
    pw_w, pw_b = params["pw_w"], params["pw_b"]          # (Cin, Cout), (Cout,)

    N, Cin, H, W = x_nchw.shape
    Cout = pw_w.shape[1]
    Cp = _round_up(Cin, 128)                             # lane-dense channel padding
    Coutp = _round_up(Cout, 128)
    Wk = _round_up(W, 8)                                 # sublane-aligned width

    out_itemsize = np.dtype(out_dtype).itemsize
    budget = _vmem_budget_bytes()
    TH = _pick_th(H, Wk, Cp, Coutp, out_itemsize, budget)
    HT = -(-H // TH)                                     # number of H tiles
    Hk = HT * TH

    # NCHW -> NHWC; one fused pad: 1-px halo + spatial round-up + channel pad.
    x = jnp.transpose(x_nchw, (0, 2, 3, 1))
    xp = jnp.pad(
        x, ((0, 0), (1, Hk - H + 1), (1, Wk - W + 1), (0, Cp - Cin))
    ).astype(jnp.bfloat16)
    # Overlapping H slabs, each carrying its 1-row halo (duplicates 2 rows/slab).
    slabs = jnp.stack([xp[:, t * TH:t * TH + TH + 2] for t in range(HT)], axis=1)
    # slabs: (N, HT, TH+2, Wk+2, Cp)

    dww = jnp.pad(dw_w, ((0, 0), (0, Cp - Cin))).astype(jnp.bfloat16)
    dwb = jnp.pad(dw_b.reshape(1, Cin), ((0, 0), (0, Cp - Cin))).astype(jnp.float32)
    pww = jnp.pad(pw_w, ((0, Cp - Cin), (0, Coutp - Cout))).astype(jnp.bfloat16)
    pwb = jnp.pad(pw_b.reshape(1, Cout), ((0, 0), (0, Coutp - Cout))).astype(jnp.float32)

    flops = 2 * N * Hk * Wk * Cp * Coutp + 18 * N * Hk * Wk * Cp
    bytes_accessed = (slabs.size * 2 + dww.size * 2 + dwb.size * 4
                      + pww.size * 2 + pwb.size * 4
                      + N * Hk * Wk * Coutp * out_itemsize)

    kernel = functools.partial(_sepconv_kernel, TH=TH, Wk=Wk)
    out = pl.pallas_call(
        kernel,
        out_shape=jax.ShapeDtypeStruct((N, HT, TH * Wk, Coutp), out_dtype),
        grid=(N, HT),
        in_specs=[
            pl.BlockSpec((1, 1, TH + 2, Wk + 2, Cp), lambda n, h: (n, h, 0, 0, 0)),
            pl.BlockSpec((9, Cp), lambda n, h: (0, 0)),
            pl.BlockSpec((1, Cp), lambda n, h: (0, 0)),
            pl.BlockSpec((Cp, Coutp), lambda n, h: (0, 0)),    # DMA'd once, stays resident
            pl.BlockSpec((1, Coutp), lambda n, h: (0, 0)),
        ],
        out_specs=pl.BlockSpec((1, 1, TH * Wk, Coutp), lambda n, h: (n, h, 0, 0)),
        compiler_params=pltpu.CompilerParams(
            dimension_semantics=("parallel", "parallel"),
            vmem_limit_bytes=budget),
        cost_estimate=pl.CostEstimate(
            flops=flops, transcendentals=0, bytes_accessed=bytes_accessed),
    )(slabs, dww, dwb, pww, pwb)

    # XLA epilogue: un-flatten, drop spatial / channel padding, back to NCHW.
    out = out.reshape(N, Hk, Wk, Coutp)[:, :H, :W, :Cout]
    return jnp.transpose(out, (0, 3, 1, 2))


# ---------------------------------------------------------------------------
# Parameter construction (deterministic, synthetic; mirrors Conv2d layouts)
# ---------------------------------------------------------------------------
def init_params(key, cin, cout):
    k0, k1, k2, k3 = jax.random.split(key, 4)
    return {
        "dw_w": 0.1 * jax.random.normal(k0, (9, cin), jnp.float32),     # tap-major
        "dw_b": 0.1 * jax.random.normal(k1, (cin,), jnp.float32),
        "pw_w": 0.1 * jax.random.normal(k2, (cin, cout), jnp.float32),
        "pw_b": 0.1 * jax.random.normal(k3, (cout,), jnp.float32),
    }


# ---------------------------------------------------------------------------
# Pure-JAX f32 reference (mirrors the PyTorch module math)
# ---------------------------------------------------------------------------
def reference_forward(x_nchw, p):
    x = jnp.transpose(x_nchw, (0, 2, 3, 1)).astype(jnp.float32)
    N, H, W, Cin = x.shape
    xp = jnp.pad(x, ((0, 0), (1, 1), (1, 1), (0, 0)))
    acc = jnp.zeros((N, H, W, Cin), jnp.float32)
    t = 0
    for ky in range(3):
        for kx in range(3):
            acc = acc + xp[:, ky:ky + H, kx:kx + W, :] * p["dw_w"][t]
            t += 1
    acc = acc + p["dw_b"]
    y = acc.reshape(N * H * W, Cin) @ p["pw_w"] + p["pw_b"]
    y = y.reshape(N, H, W, -1)
    return jnp.transpose(y, (0, 3, 1, 2))


# ---------------------------------------------------------------------------
if __name__ == "__main__":
    key = jax.random.PRNGKey(0)
    k_x, k_p = jax.random.split(key)

    N, Cin, Hs, Ws = 2, 4, 16, 16      # small shapes consistent with the module
    Cout = 8

    x = jax.random.normal(k_x, (N, Cin, Hs, Ws), jnp.float32)   # NCHW input
    params = init_params(k_p, Cin, Cout)

    fwd = jax.jit(separable_conv2d_forward)
    out = fwd(x, params)
    out = jax.block_until_ready(out)

    ref = reference_forward(x, params)
    assert out.shape == (N, Cout, Hs, Ws), out.shape
    max_err = float(jnp.max(jnp.abs(out - ref)))
    assert max_err < 2e-2, f"mismatch vs reference: {max_err}"   # bf16 matmul I/O

    print("KERNEL_OK")
</pallas_src>

<mosaic_0001>
module attributes {stable_mosaic.version = 11 : i64} {
  func.func @_sepconv_kernel(%arg0: i32, %arg1: i32, %arg2: memref<1x1x18x18x128xbf16, #tpu.memory_space<vmem>>, %arg3: memref<9x128xbf16, #tpu.memory_space<vmem>>, %arg4: memref<1x128xf32, #tpu.memory_space<vmem>>, %arg5: memref<128x128xbf16, #tpu.memory_space<vmem>>, %arg6: memref<1x128xf32, #tpu.memory_space<vmem>>, %arg7: memref<1x1x256x128xf32, #tpu.memory_space<vmem>>) attributes {dimension_semantics = [#tpu.dimension_semantics<parallel>, #tpu.dimension_semantics<parallel>], iteration_bounds = array<i64: 2, 1>, scalar_prefetch = 0 : i64, scratch_operands = 0 : i64, tpu.core_type = #tpu.core_type<tc>, window_params = [{transform_indices = @transform_0, window_bounds = array<i64: 1, 1, 18, 18, 128>}, {pipeline_mode = #tpu.pipeline_mode<synchronous>, transform_indices = @transform_1, window_bounds = array<i64: 9, 128>}, {pipeline_mode = #tpu.pipeline_mode<synchronous>, transform_indices = @transform_2, window_bounds = array<i64: 1, 128>}, {pipeline_mode = #tpu.pipeline_mode<synchronous>, transform_indices = @transform_3, window_bounds = array<i64: 128, 128>}, {pipeline_mode = #tpu.pipeline_mode<synchronous>, transform_indices = @transform_4, window_bounds = array<i64: 1, 128>}, {transform_indices = @transform_5, window_bounds = array<i64: 1, 1, 256, 128>}]} {
    %c0 = arith.constant 0 : index
    %c0_0 = arith.constant 0 : index
    %c0_1 = arith.constant 0 : index
    %c0_2 = arith.constant 0 : index
    %c0_3 = arith.constant 0 : index
    %0 = vector.load %arg2[%c0, %c0_0, %c0_1, %c0_2, %c0_3] : memref<1x1x18x18x128xbf16, #tpu.memory_space<vmem>>, vector<1x1x18x16x128xbf16>
    %1 = vector.shape_cast %0 : vector<1x1x18x16x128xbf16> to vector<18x16x128xbf16>
    %c0_4 = arith.constant 0 : index
    %c0_5 = arith.constant 0 : index
    %c0_6 = arith.constant 0 : index
    %c1 = arith.constant 1 : index
    %c0_7 = arith.constant 0 : index
    %2 = vector.load %arg2[%c0_4, %c0_5, %c0_6, %c1, %c0_7] : memref<1x1x18x18x128xbf16, #tpu.memory_space<vmem>>, vector<1x1x18x16x128xbf16>
    %3 = vector.shape_cast %2 : vector<1x1x18x16x128xbf16> to vector<18x16x128xbf16>
    %c0_8 = arith.constant 0 : index
    %c0_9 = arith.constant 0 : index
    %c0_10 = arith.constant 0 : index
    %c2 = arith.constant 2 : index
    %c0_11 = arith.constant 0 : index
    %4 = vector.load %arg2[%c0_8, %c0_9, %c0_10, %c2, %c0_11] : memref<1x1x18x18x128xbf16, #tpu.memory_space<vmem>>, vector<1x1x18x16x128xbf16>
    %5 = vector.shape_cast %4 : vector<1x1x18x16x128xbf16> to vector<18x16x128xbf16>
    %cst = arith.constant 0.000000e+00 : f32
    %6 = vector.broadcast %cst : f32 to vector<16x16x128xf32>
    %c0_12 = arith.constant 0 : index
    %c0_13 = arith.constant 0 : index
    %7 = vector.load %arg3[%c0_12, %c0_13] : memref<9x128xbf16, #tpu.memory_space<vmem>>, vector<1x128xbf16>
    %8 = vector.shape_cast %7 : vector<1x128xbf16> to vector<128xbf16>
    %9 = arith.extf %8 : vector<128xbf16> to vector<128xf32>
    %10 = vector.extract_strided_slice %1 {offsets = [0, 0, 0], sizes = [16, 16, 128], strides = [1, 1, 1]} : vector<18x16x128xbf16> to vector<16x16x128xbf16>
    %11 = arith.extf %10 : vector<16x16x128xbf16> to vector<16x16x128xf32>
    %12 = vector.shape_cast %9 : vector<128xf32> to vector<1x1x128xf32>
    %13 = vector.broadcast %12 : vector<1x1x128xf32> to vector<16x16x128xf32>
    %14 = arith.mulf %11, %13 : vector<16x16x128xf32>
    %15 = arith.addf %6, %14 : vector<16x16x128xf32>
    %c1_14 = arith.constant 1 : index
    %c0_15 = arith.constant 0 : index
    %16 = vector.load %arg3[%c1_14, %c0_15] : memref<9x128xbf16, #tpu.memory_space<vmem>>, vector<1x128xbf16>
    %17 = vector.shape_cast %16 : vector<1x128xbf16> to vector<128xbf16>
    %18 = arith.extf %17 : vector<128xbf16> to vector<128xf32>
    %19 = vector.extract_strided_slice %3 {offsets = [0, 0, 0], sizes = [16, 16, 128], strides = [1, 1, 1]} : vector<18x16x128xbf16> to vector<16x16x128xbf16>
    %20 = arith.extf %19 : vector<16x16x128xbf16> to vector<16x16x128xf32>
    %21 = vector.shape_cast %18 : vector<128xf32> to vector<1x1x128xf32>
    %22 = vector.broadcast %21 : vector<1x1x128xf32> to vector<16x16x128xf32>
    %23 = arith.mulf %20, %22 : vector<16x16x128xf32>
    %24 = arith.addf %15, %23 : vector<16x16x128xf32>
    %c2_16 = arith.constant 2 : index
    %c0_17 = arith.constant 0 : index
    %25 = vector.load %arg3[%c2_16, %c0_17] : memref<9x128xbf16, #tpu.memory_space<vmem>>, vector<1x128xbf16>
    %26 = vector.shape_cast %25 : vector<1x128xbf16> to vector<128xbf16>
    %27 = arith.extf %26 : vector<128xbf16> to vector<128xf32>
    %28 = vector.extract_strided_slice %5 {offsets = [0, 0, 0], sizes = [16, 16, 128], strides = [1, 1, 1]} : vector<18x16x128xbf16> to vector<16x16x128xbf16>
    %29 = arith.extf %28 : vector<16x16x128xbf16> to vector<16x16x128xf32>
    %30 = vector.shape_cast %27 : vector<128xf32> to vector<1x1x128xf32>
    %31 = vector.broadcast %30 : vector<1x1x128xf32> to vector<16x16x128xf32>
    %32 = arith.mulf %29, %31 : vector<16x16x128xf32>
    %33 = arith.addf %24, %32 : vector<16x16x128xf32>
    %c3 = arith.constant 3 : index
    %c0_18 = arith.constant 0 : index
    %34 = vector.load %arg3[%c3, %c0_18] : memref<9x128xbf16, #tpu.memory_space<vmem>>, vector<1x128xbf16>
    %35 = vector.shape_cast %34 : vector<1x128xbf16> to vector<128xbf16>
    %36 = arith.extf %35 : vector<128xbf16> to vector<128xf32>
    %37 = vector.extract_strided_slice %1 {offsets = [1, 0, 0], sizes = [16, 16, 128], strides = [1, 1, 1]} : vector<18x16x128xbf16> to vector<16x16x128xbf16>
    %38 = arith.extf %37 : vector<16x16x128xbf16> to vector<16x16x128xf32>
    %39 = vector.shape_cast %36 : vector<128xf32> to vector<1x1x128xf32>
    %40 = vector.broadcast %39 : vector<1x1x128xf32> to vector<16x16x128xf32>
    %41 = arith.mulf %38, %40 : vector<16x16x128xf32>
    %42 = arith.addf %33, %41 : vector<16x16x128xf32>
    %c4 = arith.constant 4 : index
    %c0_19 = arith.constant 0 : index
    %43 = vector.load %arg3[%c4, %c0_19] : memref<9x128xbf16, #tpu.memory_space<vmem>>, vector<1x128xbf16>
    %44 = vector.shape_cast %43 : vector<1x128xbf16> to vector<128xbf16>
    %45 = arith.extf %44 : vector<128xbf16> to vector<128xf32>
    %46 = vector.extract_strided_slice %3 {offsets = [1, 0, 0], sizes = [16, 16, 128], strides = [1, 1, 1]} : vector<18x16x128xbf16> to vector<16x16x128xbf16>
    %47 = arith.extf %46 : vector<16x16x128xbf16> to vector<16x16x128xf32>
    %48 = vector.shape_cast %45 : vector<128xf32> to vector<1x1x128xf32>
    %49 = vector.broadcast %48 : vector<1x1x128xf32> to vector<16x16x128xf32>
    %50 = arith.mulf %47, %49 : vector<16x16x128xf32>
    %51 = arith.addf %42, %50 : vector<16x16x128xf32>
    %c5 = arith.constant 5 : index
    %c0_20 = arith.constant 0 : index
    %52 = vector.load %arg3[%c5, %c0_20] : memref<9x128xbf16, #tpu.memory_space<vmem>>, vector<1x128xbf16>
    %53 = vector.shape_cast %52 : vector<1x128xbf16> to vector<128xbf16>
    %54 = arith.extf %53 : vector<128xbf16> to vector<128xf32>
    %55 = vector.extract_strided_slice %5 {offsets = [1, 0, 0], sizes = [16, 16, 128], strides = [1, 1, 1]} : vector<18x16x128xbf16> to vector<16x16x128xbf16>
    %56 = arith.extf %55 : vector<16x16x128xbf16> to vector<16x16x128xf32>
    %57 = vector.shape_cast %54 : vector<128xf32> to vector<1x1x128xf32>
    %58 = vector.broadcast %57 : vector<1x1x128xf32> to vector<16x16x128xf32>
    %59 = arith.mulf %56, %58 : vector<16x16x128xf32>
    %60 = arith.addf %51, %59 : vector<16x16x128xf32>
    %c6 = arith.constant 6 : index
    %c0_21 = arith.constant 0 : index
    %61 = vector.load %arg3[%c6, %c0_21] : memref<9x128xbf16, #tpu.memory_space<vmem>>, vector<1x128xbf16>
    %62 = vector.shape_cast %61 : vector<1x128xbf16> to vector<128xbf16>
    %63 = arith.extf %62 : vector<128xbf16> to vector<128xf32>
    %64 = vector.extract_strided_slice %1 {offsets = [2, 0, 0], sizes = [16, 16, 128], strides = [1, 1, 1]} : vector<18x16x128xbf16> to vector<16x16x128xbf16>
    %65 = arith.extf %64 : vector<16x16x128xbf16> to vector<16x16x128xf32>
    %66 = vector.shape_cast %63 : vector<128xf32> to vector<1x1x128xf32>
    %67 = vector.broadcast %66 : vector<1x1x128xf32> to vector<16x16x128xf32>
    %68 = arith.mulf %65, %67 : vector<16x16x128xf32>
    %69 = arith.addf %60, %68 : vector<16x16x128xf32>
    %c7 = arith.constant 7 : index
    %c0_22 = arith.constant 0 : index
    %70 = vector.load %arg3[%c7, %c0_22] : memref<9x128xbf16, #tpu.memory_space<vmem>>, vector<1x128xbf16>
    %71 = vector.shape_cast %70 : vector<1x128xbf16> to vector<128xbf16>
    %72 = arith.extf %71 : vector<128xbf16> to vector<128xf32>
    %73 = vector.extract_strided_slice %3 {offsets = [2, 0, 0], sizes = [16, 16, 128], strides = [1, 1, 1]} : vector<18x16x128xbf16> to vector<16x16x128xbf16>
    %74 = arith.extf %73 : vector<16x16x128xbf16> to vector<16x16x128xf32>
    %75 = vector.shape_cast %72 : vector<128xf32> to vector<1x1x128xf32>
    %76 = vector.broadcast %75 : vector<1x1x128xf32> to vector<16x16x128xf32>
    %77 = arith.mulf %74, %76 : vector<16x16x128xf32>
    %78 = arith.addf %69, %77 : vector<16x16x128xf32>
    %c8 = arith.constant 8 : index
    %c0_23 = arith.constant 0 : index
    %79 = vector.load %arg3[%c8, %c0_23] : memref<9x128xbf16, #tpu.memory_space<vmem>>, vector<1x128xbf16>
    %80 = vector.shape_cast %79 : vector<1x128xbf16> to vector<128xbf16>
    %81 = arith.extf %80 : vector<128xbf16> to vector<128xf32>
    %82 = vector.extract_strided_slice %5 {offsets = [2, 0, 0], sizes = [16, 16, 128], strides = [1, 1, 1]} : vector<18x16x128xbf16> to vector<16x16x128xbf16>
    %83 = arith.extf %82 : vector<16x16x128xbf16> to vector<16x16x128xf32>
    %84 = vector.shape_cast %81 : vector<128xf32> to vector<1x1x128xf32>
    %85 = vector.broadcast %84 : vector<1x1x128xf32> to vector<16x16x128xf32>
    %86 = arith.mulf %83, %85 : vector<16x16x128xf32>
    %87 = arith.addf %78, %86 : vector<16x16x128xf32>
    %c0_24 = arith.constant 0 : index
    %c0_25 = arith.constant 0 : index
    %88 = vector.load %arg4[%c0_24, %c0_25] : memref<1x128xf32, #tpu.memory_space<vmem>>, vector<1x128xf32>
    %89 = vector.shape_cast %88 : vector<1x128xf32> to vector<1x1x128xf32>
    %90 = vector.broadcast %89 : vector<1x1x128xf32> to vector<16x16x128xf32>
    %91 = arith.addf %87, %90 : vector<16x16x128xf32>
    %92 = vector.shape_cast %91 : vector<16x16x128xf32> to vector<256x128xf32>
    %93 = arith.truncf %92 : vector<256x128xf32> to vector<256x128xbf16>
    %c0_26 = arith.constant 0 : index
    %c0_27 = arith.constant 0 : index
    %94 = vector.load %arg5[%c0_26, %c0_27] : memref<128x128xbf16, #tpu.memory_space<vmem>>, vector<128x128xbf16>
    %cst_28 = arith.constant dense<0.000000e+00> : vector<256x128xf32>
    %95 = tpu.matmul %93, %94, %cst_28 {dimension_numbers = #tpu.dot_dimension_numbers<[1], [0], [0], [1], [0, 0, 1, 1], [], []>} : vector<256x128xbf16>, vector<128x128xbf16>, vector<256x128xf32> -> vector<256x128xf32>
    %c0_29 = arith.constant 0 : index
    %c0_30 = arith.constant 0 : index
    %96 = vector.load %arg6[%c0_29, %c0_30] : memref<1x128xf32, #tpu.memory_space<vmem>>, vector<1x128xf32>
    %97 = vector.broadcast %96 : vector<1x128xf32> to vector<256x128xf32>
    %98 = arith.addf %95, %97 : vector<256x128xf32>
    %99 = vector.shape_cast %98 : vector<256x128xf32> to vector<1x1x256x128xf32>
    %c0_31 = arith.constant 0 : index
    %c0_32 = arith.constant 0 : index
    %c0_33 = arith.constant 0 : index
    %c0_34 = arith.constant 0 : index
    %100 = vector.load %arg7[%c0_31, %c0_32, %c0_33, %c0_34] : memref<1x1x256x128xf32, #tpu.memory_space<vmem>>, vector<1x1x256x128xf32>
    tpu.vector_store %arg7[%c0_31, %c0_32, %c0_33, %c0_34], %99 {strides = array<i32>} : memref<1x1x256x128xf32, #tpu.memory_space<vmem>>, vector<1x1x256x128xf32>,
    return
  }
  func.func @transform_0(%arg0: i32, %arg1: i32) -> (i32, i32, i32, i32, i32) {
    %c0_i32 = arith.constant 0 : i32
    %c0_i32_0 = arith.constant 0 : i32
    %c0_i32_1 = arith.constant 0 : i32
    %c0_i32_2 = arith.constant 0 : i32
    return %arg0, %arg1, %c0_i32, %c0_i32_0, %c0_i32_1 : i32, i32, i32, i32, i32
  }
  func.func @transform_1(%arg0: i32, %arg1: i32) -> (i32, i32) {
    %c0_i32 = arith.constant 0 : i32
    %c0_i32_0 = arith.constant 0 : i32
    %c0_i32_1 = arith.constant 0 : i32
    return %c0_i32, %c0_i32_0 : i32, i32
  }
  func.func @transform_2(%arg0: i32, %arg1: i32) -> (i32, i32) {
    %c0_i32 = arith.constant 0 : i32
    %c0_i32_0 = arith.constant 0 : i32
    %c0_i32_1 = arith.constant 0 : i32
    return %c0_i32, %c0_i32_0 : i32, i32
  }
  func.func @transform_3(%arg0: i32, %arg1: i32) -> (i32, i32) {
    %c0_i32 = arith.constant 0 : i32
    %c0_i32_0 = arith.constant 0 : i32
    %c0_i32_1 = arith.constant 0 : i32
    return %c0_i32, %c0_i32_0 : i32, i32
  }
  func.func @transform_4(%arg0: i32, %arg1: i32) -> (i32, i32) {
    %c0_i32 = arith.constant 0 : i32
    %c0_i32_0 = arith.constant 0 : i32
    %c0_i32_1 = arith.constant 0 : i32
    return %c0_i32, %c0_i32_0 : i32, i32
  }
  func.func @transform_5(%arg0: i32, %arg1: i32) -> (i32, i32, i32, i32) {
    %c0_i32 = arith.constant 0 : i32
    %c0_i32_0 = arith.constant 0 : i32
    %c0_i32_1 = arith.constant 0 : i32
    return %arg0, %arg1, %c0_i32, %c0_i32_0 : i32, i32, i32, i32
  }
}

</mosaic_0001>

<llo_original>
// kernel: separable_conv2d_forward.1
$region0: #{separable_conv2d_forward.1}
  #allocation0 [shape = 'u32[]', space=smem, size = 0x4, offset = 0x4, fixed_abs, tag = 'smem constant byte address 0x4 - core index']
  #allocation1 [shape = 'u32[144,128]{1,0:T(1,128)}', space=vmem, size = 0x12000, scoped, tag = 'internal scratch']
  %s0 = inlined_call_operand.vmem [shape: bf16[2,1,18,18,128], index: 0, kind: input, shape index: {}]
  %s1 = inlined_call_operand.vmem [shape: bf16[9,128], index: 1, kind: input, shape index: {}]
  %s2 = inlined_call_operand.vmem [shape: f32[1,128], index: 2, kind: input, shape index: {}]
  %s3 = inlined_call_operand.vmem [shape: bf16[128,128], index: 3, kind: input, shape index: {}]
  %s4 = inlined_call_operand.vmem [shape: f32[1,128], index: 4, kind: input, shape index: {}]
  %s5 = inlined_call_operand.vmem [shape: f32[2,1,256,128], index: 5, kind: output, shape index: {}]
  %s6 = sld [smem:[#allocation0]]
  $region53: #{separable_conv2d_forward.1} parent=0
    _
  %s8 = ssub.s32 1, %s6
  %s9 = scalar_select 0, %s8, %s6
  loop: start=0, step=1, limit=4
  $region2: #{separable_conv2d_forward.1} parent=0 // loop_pre_header
    _
  $region3: #{separable_conv2d_forward.1} parent=0 // loop_header
    %s11 = sphi 0, %s15
    %p12 = scmp.ge.s32.totalorder %s11, 4
    %s18 = sphi 0, %s30
    %s19 = sphi 0, %s26
    %s20 = sphi 0, %s18
    %s21 = sphi 0, %s19
    %s22 = sphi 0, %s20
    %s23 = sphi 0, %s21
    %s35 = sphi 0, %s37
    %s38 = sphi 0, %s35
    %s39 = sphi 0, %s38
    %s55 = sphi 0, %s39
    %s59 = sphi 0, %s59
    %s61 = sphi 0, %s59
    %s62 = sphi 0, %s61
    %s76 = sphi 0, %s62
    %s80 = sphi 0, %s80
    %s82 = sphi 0, %s80
    %s83 = sphi 0, %s82
    %s97 = sphi 0, %s83
    %s101 = sphi 0, %s101
    %s103 = sphi 0, %s101
    %s104 = sphi 0, %s103
    %s118 = sphi 0, %s104
    %s122 = sphi 0, %s122
    %s124 = sphi 0, %s122
    %s125 = sphi 0, %s124
    %s139 = sphi 0, %s125
    %s147 = sphi 0, %s149
    %s150 = sphi 0, %s147
    %s151 = sphi 0, %s150
    %s167 = sphi 0, %s151
  $region4: #{separable_conv2d_forward.1} parent=0 // loop_header_branch
    %14 = sbr.rel (%p12) target = $region8
  $region5: #{separable_conv2d_forward.1} parent=0 // loop_body
    %s16 = ssub.s32 %s11, 1
    %s17 = ssub.s32 %s11, 2
    %s24 = sadd.s32 1, %s19
    %p25 = scmp.ge.s32.totalorder %s24, 1
    %s26 = scalar_select %p25, 0, %s24
    %s27 = sadd.s32 1, %s18
    %s28 = scalar_select %p25, %s27, %s18
    %p29 = scmp.ge.s32.totalorder %s28, 2
    %s30 = scalar_select %p29, 0, %s28
    %s31 = ssub.s32 %s18, %s30
    %s32 = ssub.s32 %s19, %s26
    %s33 = sor.u32 %s31, %s32
    %p34 = scmp.eq.s32.totalorder %s33, 0
    %s36 = sadd.s32 %s35, 1
    %s37 = scalar_select %p34, %s35, %s36
    %p40 = pneg %p34
    %p41 = scmp.eq.s32.totalorder %s11, 1
    %p42 = por %p40, %p41
    %p43 = scmp.ne.s32.totalorder %s35, %s38
    %p44 = scmp.eq.s32.totalorder %s11, 0
    %p45 = por %p43, %p44
    %p46 = scmp.ne.s32.totalorder %s35, %s38
    %p47 = scmp.eq.s32.totalorder %s16, 1
    %p48 = por %p46, %p47
    %p49 = scmp.ne.s32.totalorder %s38, %s39
    %p50 = scmp.eq.s32.totalorder %s16, 0
    %p51 = por %p49, %p50
    %p52 = scmp.ne.s32.totalorder %s38, %s39
    %p53 = scmp.eq.s32.totalorder %s17, 1
    %p54 = por %p52, %p53
    %p56 = scmp.ne.s32.totalorder %s39, %s55
    %p57 = scmp.eq.s32.totalorder %s17, 0
    %p58 = por %p56, %p57
    %s60 = sadd.s32 %s59, 1
    %p63 = scmp.eq.s32.totalorder %s11, 1
    %p64 = scmp.ne.s32.totalorder %s59, %s61
    %p65 = scmp.eq.s32.totalorder %s11, 0
    %p66 = por %p64, %p65
    %p67 = scmp.ne.s32.totalorder %s59, %s61
    %p68 = scmp.eq.s32.totalorder %s16, 1
    %p69 = por %p67, %p68
    %p70 = scmp.ne.s32.totalorder %s61, %s62
    %p71 = scmp.eq.s32.totalorder %s16, 0
    %p72 = por %p70, %p71
    %p73 = scmp.ne.s32.totalorder %s61, %s62
    %p74 = scmp.eq.s32.totalorder %s17, 1
    %p75 = por %p73, %p74
    %p77 = scmp.ne.s32.totalorder %s62, %s76
    %p78 = scmp.eq.s32.totalorder %s17, 0
    %p79 = por %p77, %p78
    %s81 = sadd.s32 %s80, 1
    %p84 = scmp.eq.s32.totalorder %s11, 1
    %p85 = scmp.ne.s32.totalorder %s80, %s82
    %p86 = scmp.eq.s32.totalorder %s11, 0
    %p87 = por %p85, %p86
    %p88 = scmp.ne.s32.totalorder %s80, %s82
    %p89 = scmp.eq.s32.totalorder %s16, 1
    %p90 = por %p88, %p89
    %p91 = scmp.ne.s32.totalorder %s82, %s83
    %p92 = scmp.eq.s32.totalorder %s16, 0
    %p93 = por %p91, %p92
    %p94 = scmp.ne.s32.totalorder %s82, %s83
    %p95 = scmp.eq.s32.totalorder %s17, 1
    %p96 = por %p94, %p95
    %p98 = scmp.ne.s32.totalorder %s83, %s97
    %p99 = scmp.eq.s32.totalorder %s17, 0
    %p100 = por %p98, %p99
    %s102 = sadd.s32 %s101, 1
    %p105 = scmp.eq.s32.totalorder %s11, 1
    %p106 = scmp.ne.s32.totalorder %s101, %s103
    %p107 = scmp.eq.s32.totalorder %s11, 0
    %p108 = por %p106, %p107
    %p109 = scmp.ne.s32.totalorder %s101, %s103
    %p110 = scmp.eq.s32.totalorder %s16, 1
    %p111 = por %p109, %p110
    %p112 = scmp.ne.s32.totalorder %s103, %s104
    %p113 = scmp.eq.s32.totalorder %s16, 0
    %p114 = por %p112, %p113
    %p115 = scmp.ne.s32.totalorder %s103, %s104
    %p116 = scmp.eq.s32.totalorder %s17, 1
    %p117 = por %p115, %p116
    %p119 = scmp.ne.s32.totalorder %s104, %s118
    %p120 = scmp.eq.s32.totalorder %s17, 0
    %p121 = por %p119, %p120
    %s123 = sadd.s32 %s122, 1
    %p126 = scmp.eq.s32.totalorder %s11, 1
    %p127 = scmp.ne.s32.totalorder %s122, %s124
    %p128 = scmp.eq.s32.totalorder %s11, 0
    %p129 = por %p127, %p128
    %p130 = scmp.ne.s32.totalorder %s122, %s124
    %p131 = scmp.eq.s32.totalorder %s16, 1
    %p132 = por %p130, %p131
    %p133 = scmp.ne.s32.totalorder %s124, %s125
    %p134 = scmp.eq.s32.totalorder %s16, 0
    %p135 = por %p133, %p134
    %p136 = scmp.ne.s32.totalorder %s124, %s125
    %p137 = scmp.eq.s32.totalorder %s17, 1
    %p138 = por %p136, %p137
    %p140 = scmp.ne.s32.totalorder %s125, %s139
    %p141 = scmp.eq.s32.totalorder %s17, 0
    %p142 = por %p140, %p141
    %s143 = ssub.s32 %s18, %s30
    %s144 = ssub.s32 %s19, %s26
    %s145 = sor.u32 %s143, %s144
    %p146 = scmp.eq.s32.totalorder %s145, 0
    %s148 = sadd.s32 %s147, 1
    %s149 = scalar_select %p146, %s147, %s148
    %p152 = pneg %p146
    %p153 = scmp.eq.s32.totalorder %s11, 1
    %p154 = por %p152, %p153
    %p155 = scmp.ne.s32.totalorder %s147, %s150
    %p156 = scmp.eq.s32.totalorder %s11, 0
    %p157 = por %p155, %p156
    %p158 = scmp.ne.s32.totalorder %s147, %s150
    %p159 = scmp.eq.s32.totalorder %s16, 1
    %p160 = por %p158, %p159
    %p161 = scmp.ne.s32.totalorder %s150, %s151
    %p162 = scmp.eq.s32.totalorder %s16, 0
    %p163 = por %p161, %p162
    %p164 = scmp.ne.s32.totalorder %s150, %s151
    %p165 = scmp.eq.s32.totalorder %s17, 1
    %p166 = por %p164, %p165
    %p168 = scmp.ne.s32.totalorder %s151, %s167
    %p169 = scmp.eq.s32.totalorder %s17, 0
    %p170 = por %p168, %p169
    %p171 = scmp.le.s32.totalorder 1, %s11
    %p172 = scmp.lt.s32.totalorder %s11, 3
    %p173 = pnand %p171, %p172
    %p174 = pneg %p173
    // Predicated region
    $region9: #{separable_conv2d_forward.1} parent=5 // pred_check
      _
    $region10: #{separable_conv2d_forward.1} parent=5 // pred_check_branch
      %176 = sbr.rel (%p173) target = $region12
    $region11: #{separable_conv2d_forward.1} parent=5 // pred_region
      %s177 = ssub.s32 %s11, 1
      // Predicated region
      $region13: #{separable_conv2d_forward.1} parent=11 // pred_check
        %p178 = pneg %p72
      $region14: #{separable_conv2d_forward.1} parent=11 // pred_check_branch
        %180 = sbr.rel (%p178) target = $region16
      $region15: #{separable_conv2d_forward.1} parent=11 // pred_region
        _
      $region16: #{separable_conv2d_forward.1} parent=11 // pred_fallthru
        _
      // Predicated region
      $region17: #{separable_conv2d_forward.1} parent=11 // pred_check
        %p181 = pneg %p93
      $region18: #{separable_conv2d_forward.1} parent=11 // pred_check_branch
        %183 = sbr.rel (%p181) target = $region20
      $region19: #{separable_conv2d_forward.1} parent=11 // pred_region
        _
      $region20: #{separable_conv2d_forward.1} parent=11 // pred_fallthru
        _
      // Predicated region
      $region21: #{separable_conv2d_forward.1} parent=11 // pred_check
        %p184 = pneg %p114
      $region22: #{separable_conv2d_forward.1} parent=11 // pred_check_branch
        %186 = sbr.rel (%p184) target = $region24
      $region23: #{separable_conv2d_forward.1} parent=11 // pred_region
        _
      $region24: #{separable_conv2d_forward.1} parent=11 // pred_fallthru
        _
      // Predicated region
      $region25: #{separable_conv2d_forward.1} parent=11 // pred_check
        %p187 = pneg %p135
      $region26: #{separable_conv2d_forward.1} parent=11 // pred_check_branch
        %189 = sbr.rel (%p187) target = $region28
      $region27: #{separable_conv2d_forward.1} parent=11 // pred_region
        _
      $region28: #{separable_conv2d_forward.1} parent=11 // pred_fallthru
        _
    $region12: #{separable_conv2d_forward.1} parent=5 // pred_fallthru
      _
    %p190 = scmp.lt.s32.totalorder %s11, 2
    // Predicated region
    $region29: #{separable_conv2d_forward.1} parent=5 // pred_check
      %p191 = pneg %p190
    $region30: #{separable_conv2d_forward.1} parent=5 // pred_check_branch
      %193 = sbr.rel (%p191) target = $region32
    $region31: #{separable_conv2d_forward.1} parent=5 // pred_region
      // Predicated region
      $region33: #{separable_conv2d_forward.1} parent=31 // pred_check
        %p194 = pneg %p45
      $region34: #{separable_conv2d_forward.1} parent=31 // pred_check_branch
        %196 = sbr.rel (%p194) target = $region36
      $region35: #{separable_conv2d_forward.1} parent=31 // pred_region
        %p197 = scmp.lt.s32.totalorder %s18, 1
        %s198 = scalar_select %p197, %s18, 1
        %p199 = scmp.lt.s32.totalorder %s19, 0
        %s200 = scalar_select %p199, %s19, 0
        %s201 = smul.addr %s200, 54
        %s202 = smul.addr %s198, 54
        %s203 = sadd.s32 %s201, %s202
        %s204 = smul.addr %s203, 4
        %s205 = scalar_lea.vmem %s0, %s204
      $region36: #{separable_conv2d_forward.1} parent=31 // pred_fallthru
        _
    $region32: #{separable_conv2d_forward.1} parent=5 // pred_fallthru
      _
    %p206 = scmp.le.s32.totalorder 1, %s11
    %p207 = scmp.lt.s32.totalorder %s11, 3
    %p208 = pnand %p206, %p207
    %p209 = pneg %p208
    // Predicated region
    $region37: #{separable_conv2d_forward.1} parent=5 // pred_check
      _
    $region38: #{separable_conv2d_forward.1} parent=5 // pred_check_branch
      %211 = sbr.rel (%p208) target = $region40
    $region39: #{separable_conv2d_forward.1} parent=5 // pred_region
      %s212 = ssub.s32 %s11, 1
      %p213 = scmp.lt.s32.totalorder %s20, 1
      %s214 = scalar_select %p213, %s20, 1
      %p215 = scmp.lt.s32.totalorder %s21, 0
      %s216 = scalar_select %p215, %s21, 0
      %s217 = smul.addr %s216, 54
      %s218 = smul.addr %s214, 54
      %s219 = sadd.s32 %s217, %s218
      %s220 = smul.addr %s219, 4
      %s221 = scalar_lea.vmem %s0, %s220
      %p222 = pneg %p51
      %p223 = pneg %p48
      %p224 = pneg %p72
      %p225 = pneg %p69
      %p226 = pneg %p93
      %p227 = pneg %p90
      %p228 = pneg %p114
      %p229 = pneg %p111
      %p230 = pneg %p135
      %p231 = pneg %p132
      %p232 = pneg %p163
      %p233 = pneg %p160
      %p234 = scmp.lt.s32.totalorder %s20, 1
      %s235 = scalar_select %p234, %s20, 1
      %p236 = scmp.lt.s32.totalorder %s21, 0
      %s237 = scalar_select %p236, %s21, 0
      %s238 = smul.addr %s237, 32
      %s239 = smul.addr %s235, 32
      %s240 = sadd.s32 %s238, %s239
      %s241 = smul.addr %s240, 8
      %s242 = scalar_lea.vmem %s5, %s241
      %p243 = scmp.lt.s32.totalorder %s20, 1
      %s244 = scalar_select %p243, %s20, 1
      %p245 = scmp.lt.s32.totalorder %s21, 0
      %s246 = scalar_select %p245, %s21, 0
      %s247 = smul.addr %s246, 54
      %s248 = smul.addr %s244, 54
      %s249 = sadd.s32 %s247, %s248
      %s250 = smul.addr %s249, 4
      %s251 = scalar_lea.vmem %s0, %s250
      %p252 = scmp.lt.s32.totalorder %s20, 1
      %s253 = scalar_select %p252, %s20, 1
      %p254 = scmp.lt.s32.totalorder %s21, 0
      %s255 = scalar_select %p254, %s21, 0
      %s256 = smul.addr %s255, 32
      %s257 = smul.addr %s253, 32
      %s258 = sadd.s32 %s256, %s257
      %s259 = smul.addr %s258, 8
      %s260 = scalar_lea.vmem %s5, %s259
      %v262 = vld [vmem:[%s251] sm:$0xf]
      %v263 = vld [vmem:[%s251 + $0x4] sm:$0xf]
      %v264 = vld [vmem:[%s251 + $0xc] sm:$0xf]
      %v265 = vld [vmem:[%s251 + $0x10] sm:$0xf]
      %v266 = vld [vmem:[%s251 + $0x18] sm:$0xf]
      %v267 = vld [vmem:[%s251 + $0x1c] sm:$0xf]
      %v268 = vld [vmem:[%s251 + $0x24] sm:$0xf]
      %v269 = vld [vmem:[%s251 + $0x28] sm:$0xf]
      %v270 = vld [vmem:[%s251 + $0x30] sm:$0xf]
      %v271 = vld [vmem:[%s251 + $0x34] sm:$0xf]
      %v272 = vld [vmem:[%s251 + $0x3c] sm:$0xf]
      %v273 = vld [vmem:[%s251 + $0x40] sm:$0xf]
      %v274 = vld [vmem:[%s251 + $0x48] sm:$0xf]
      %v275 = vld [vmem:[%s251 + $0x4c] sm:$0xf]
      %v276 = vld [vmem:[%s251 + $0x54] sm:$0xf]
      %v277 = vld [vmem:[%s251 + $0x58] sm:$0xf]
      %v278 = vld [vmem:[%s251 + $0x60] sm:$0xf]
      %v279 = vld [vmem:[%s251 + $0x64] sm:$0xf]
      %v280 = vld [vmem:[%s251 + $0x6c] sm:$0xf]
      %v281 = vld [vmem:[%s251 + $0x70] sm:$0xf]
      %v282 = vld [vmem:[%s251 + $0x78] sm:$0xf]
      %v283 = vld [vmem:[%s251 + $0x7c] sm:$0xf]
      %v284 = vld [vmem:[%s251 + $0x84] sm:$0xf]
      %v285 = vld [vmem:[%s251 + $0x88] sm:$0xf]
      %v286 = vld [vmem:[%s251 + $0x90] sm:$0xf]
      %v287 = vld [vmem:[%s251 + $0x94] sm:$0xf]
      %v288 = vld [vmem:[%s251 + $0x9c] sm:$0xf]
      %v289 = vld [vmem:[%s251 + $0xa0] sm:$0xf]
      %v290 = vld [vmem:[%s251 + $0xa8] sm:$0xf]
      %v291 = vld [vmem:[%s251 + $0xac] sm:$0xf]
      %v292 = vld [vmem:[%s251 + $0xb4] sm:$0xf]
      %v293 = vld [vmem:[%s251 + $0xb8] sm:$0xf]
      %v294 = vld [vmem:[%s251 + $0xc0] sm:$0xf]
      %v295 = vld [vmem:[%s251 + $0xc4] sm:$0xf]
      %v296 = vld [vmem:[%s251 + $0xcc] sm:$0xf]
      %v297 = vld [vmem:[%s251 + $0xd0] sm:$0xf]
      %v298 = vld [vmem:[%s251 + $0x8] sm:$0x1]
      %v299 = vld [vmem:[%s251 + $0x14] sm:$0x1]
      %v300 = vld [vmem:[%s251 + $0x20] sm:$0x1]
      %v301 = vld [vmem:[%s251 + $0x2c] sm:$0x1]
      %v302 = vld [vmem:[%s251 + $0x38] sm:$0x1]
      %v303 = vld [vmem:[%s251 + $0x44] sm:$0x1]
      %v304 = vld [vmem:[%s251 + $0x50] sm:$0x1]
      %v305 = vld [vmem:[%s251 + $0x5c] sm:$0x1]
      %v306 = vld [vmem:[%s251 + $0x68] sm:$0x1]
      %v307 = vld [vmem:[%s251 + $0x74] sm:$0x1]
      %v308 = vld [vmem:[%s251 + $0x80] sm:$0x1]
      %v309 = vld [vmem:[%s251 + $0x8c] sm:$0x1]
      %v310 = vld [vmem:[%s251 + $0x98] sm:$0x1]
      %v311 = vld [vmem:[%s251 + $0xa4] sm:$0x1]
      %v312 = vld [vmem:[%s251 + $0xb0] sm:$0x1]
      %v313 = vld [vmem:[%s251 + $0xbc] sm:$0x1]
      %v314 = vld [vmem:[%s251 + $0xc8] sm:$0x1]
      %v315 = vld [vmem:[%s251 + $0xd4] sm:$0x1]
      %v316 = vld [vmem:[%s251] sm:$0xe]
      %v317 = vld [vmem:[%s251 + $0xc] sm:$0xe]
      %v318 = vld [vmem:[%s251 + $0x18] sm:$0xe]
      %v319 = vld [vmem:[%s251 + $0x24] sm:$0xe]
      %v320 = vld [vmem:[%s251 + $0x30] sm:$0xe]
      %v321 = vld [vmem:[%s251 + $0x3c] sm:$0xe]
      %v322 = vld [vmem:[%s251 + $0x48] sm:$0xe]
      %v323 = vld [vmem:[%s251 + $0x54] sm:$0xe]
      %v324 = vld [vmem:[%s251 + $0x60] sm:$0xe]
      %v325 = vld [vmem:[%s251 + $0x6c] sm:$0xe]
      %v326 = vld [vmem:[%s251 + $0x78] sm:$0xe]
      %v327 = vld [vmem:[%s251 + $0x84] sm:$0xe]
      %v328 = vld [vmem:[%s251 + $0x90] sm:$0xe]
      %v329 = vld [vmem:[%s251 + $0x9c] sm:$0xe]
      %v330 = vld [vmem:[%s251 + $0xa8] sm:$0xe]
      %v331 = vld [vmem:[%s251 + $0xb4] sm:$0xe]
      %v332 = vld [vmem:[%s251 + $0xc0] sm:$0xe]
      %v333 = vld [vmem:[%s251 + $0xcc] sm:$0xe]
      %v334 = vld [vmem:[%s1] sm:$0x1]
      %v335 = vunpack.c.l.bf16 %v334
      %v336 = vunpack.c.l.bf16 %v262
      %v337 = vunpack.c.l.bf16 %v263
      %v338 = vunpack.c.l.bf16 %v264
      %v339 = vunpack.c.l.bf16 %v265
      %v340 = vunpack.c.l.bf16 %v266
      %v341 = vunpack.c.l.bf16 %v267
      %v342 = vunpack.c.l.bf16 %v268
      %v343 = vunpack.c.l.bf16 %v269
      %v344 = vunpack.c.l.bf16 %v270
      %v345 = vunpack.c.l.bf16 %v271
      %v346 = vunpack.c.l.bf16 %v272
      %v347 = vunpack.c.l.bf16 %v273
      %v348 = vunpack.c.l.bf16 %v274
      %v349 = vunpack.c.l.bf16 %v275
      %v350 = vunpack.c.l.bf16 %v276
      %v351 = vunpack.c.l.bf16 %v277
      %v352 = vunpack.c.l.bf16 %v278
      %v353 = vunpack.c.l.bf16 %v279
      %v354 = vunpack.c.l.bf16 %v280
      %v355 = vunpack.c.l.bf16 %v281
      %v356 = vunpack.c.l.bf16 %v282
      %v357 = vunpack.c.l.bf16 %v283
      %v358 = vunpack.c.l.bf16 %v284
      %v359 = vunpack.c.l.bf16 %v285
      %v360 = vunpack.c.l.bf16 %v286
      %v361 = vunpack.c.l.bf16 %v287
      %v362 = vunpack.c.l.bf16 %v288
      %v363 = vunpack.c.l.bf16 %v289
      %v364 = vunpack.c.l.bf16 %v290
      %v365 = vunpack.c.l.bf16 %v291
      %v366 = vunpack.c.l.bf16 %v292
      %v367 = vunpack.c.l.bf16 %v293
      %v368 = vlaneseq
      %v369 = vshrl.u32 %v368, 7
      %v370 = vsub.s32 0, %v369
      %v371 = vrot.slane %v335, %v370
      %v372 = vmul.f32 %v336, %v371
      %v373 = vmul.f32 %v337, %v371
      %v374 = vmul.f32 %v338, %v371
      %v375 = vmul.f32 %v339, %v371
      %v376 = vmul.f32 %v340, %v371
      %v377 = vmul.f32 %v341, %v371
      %v378 = vmul.f32 %v342, %v371
      %v379 = vmul.f32 %v343, %v371
      %v380 = vmul.f32 %v344, %v371
      %v381 = vmul.f32 %v345, %v371
      %v382 = vmul.f32 %v346, %v371
      %v383 = vmul.f32 %v347, %v371
      %v384 = vmul.f32 %v348, %v371
      %v385 = vmul.f32 %v349, %v371
      %v386 = vmul.f32 %v350, %v371
      %v387 = vmul.f32 %v351, %v371
      %v388 = vmul.f32 %v352, %v371
      %v389 = vmul.f32 %v353, %v371
      %v390 = vmul.f32 %v354, %v371
      %v391 = vmul.f32 %v355, %v371
      %v392 = vmul.f32 %v356, %v371
      %v393 = vmul.f32 %v357, %v371
      %v394 = vmul.f32 %v358, %v371
      %v395 = vmul.f32 %v359, %v371
      %v396 = vmul.f32 %v360, %v371
      %v397 = vmul.f32 %v361, %v371
      %v398 = vmul.f32 %v362, %v371
      %v399 = vmul.f32 %v363, %v371
      %v400 = vmul.f32 %v364, %v371
      %v401 = vmul.f32 %v365, %v371
      %v402 = vmul.f32 %v366, %v371
      %v403 = vmul.f32 %v367, %v371
      %v404 = vadd.f32 %v372, 0.0
      %v405 = vadd.f32 %v373, 0.0
      %v406 = vadd.f32 %v374, 0.0
      %v407 = vadd.f32 %v375, 0.0
      %v408 = vadd.f32 %v376, 0.0
      %v409 = vadd.f32 %v377, 0.0
      %v410 = vadd.f32 %v378, 0.0
      %v411 = vadd.f32 %v379, 0.0
      %v412 = vadd.f32 %v380, 0.0
      %v413 = vadd.f32 %v381, 0.0
      %v414 = vadd.f32 %v382, 0.0
      %v415 = vadd.f32 %v383, 0.0
      %v416 = vadd.f32 %v384, 0.0
      %v417 = vadd.f32 %v385, 0.0
      %v418 = vadd.f32 %v386, 0.0
      %v419 = vadd.f32 %v387, 0.0
      %v420 = vadd.f32 %v388, 0.0
      %v421 = vadd.f32 %v389, 0.0
      %v422 = vadd.f32 %v390, 0.0
      %v423 = vadd.f32 %v391, 0.0
      %v424 = vadd.f32 %v392, 0.0
      %v425 = vadd.f32 %v393, 0.0
      %v426 = vadd.f32 %v394, 0.0
      %v427 = vadd.f32 %v395, 0.0
      %v428 = vadd.f32 %v396, 0.0
      %v429 = vadd.f32 %v397, 0.0
      %v430 = vadd.f32 %v398, 0.0
      %v431 = vadd.f32 %v399, 0.0
      %v432 = vadd.f32 %v400, 0.0
      %v433 = vadd.f32 %v401, 0.0
      %v434 = vadd.f32 %v402, 0.0
      %v435 = vadd.f32 %v403, 0.0
      %v436 = vunpack.c.l.bf16 %v298
      %v437 = vunpack.c.l.bf16 %v299
      %v438 = vunpack.c.l.bf16 %v300
      %v439 = vunpack.c.l.bf16 %v301
      %v440 = vunpack.c.l.bf16 %v302
      %v441 = vunpack.c.l.bf16 %v303
      %v442 = vunpack.c.l.bf16 %v304
      %v443 = vunpack.c.l.bf16 %v305
      %v444 = vunpack.c.l.bf16 %v306
      %v445 = vunpack.c.l.bf16 %v307
      %v446 = vunpack.c.l.bf16 %v308
      %v447 = vunpack.c.l.bf16 %v309
      %v448 = vunpack.c.l.bf16 %v310
      %v449 = vunpack.c.l.bf16 %v311
      %v450 = vunpack.c.l.bf16 %v312
      %v451 = vunpack.c.l.bf16 %v313
      %v452 = vlaneseq
      %v453 = vshrl.u32 %v452, 7
      %v454 = vsub.s32 1, %v453
      %v455 = vrot.slane %v335, %v454
      %v456 = vmul.f32 %v336, %v455
      %v457 = vmul.f32 %v337, %v455
      %v458 = vmul.f32 %v436, %v455
      %v459 = vmul.f32 %v338, %v455
      %v460 = vmul.f32 %v339, %v455
      %v461 = vmul.f32 %v437, %v455
      %v462 = vmul.f32 %v340, %v455
      %v463 = vmul.f32 %v341, %v455
      %v464 = vmul.f32 %v438, %v455
      %v465 = vmul.f32 %v342, %v455
      %v466 = vmul.f32 %v343, %v455
      %v467 = vmul.f32 %v439, %v455
      %v468 = vmul.f32 %v344, %v455
      %v469 = vmul.f32 %v345, %v455
      %v470 = vmul.f32 %v440, %v455
      %v471 = vmul.f32 %v346, %v455
      %v472 = vmul.f32 %v347, %v455
      %v473 = vmul.f32 %v441, %v455
      %v474 = vmul.f32 %v348, %v455
      %v475 = vmul.f32 %v349, %v455
      %v476 = vmul.f32 %v442, %v455
      %v477 = vmul.f32 %v350, %v455
      %v478 = vmul.f32 %v351, %v455
      %v479 = vmul.f32 %v443, %v455
      %v480 = vmul.f32 %v352, %v455
      %v481 = vmul.f32 %v353, %v455
      %v482 = vmul.f32 %v444, %v455
      %v483 = vmul.f32 %v354, %v455
      %v484 = vmul.f32 %v355, %v455
      %v485 = vmul.f32 %v445, %v455
      %v486 = vmul.f32 %v356, %v455
      %v487 = vmul.f32 %v357, %v455
      %v488 = vmul.f32 %v446, %v455
      %v489 = vmul.f32 %v358, %v455
      %v490 = vmul.f32 %v359, %v455
      %v491 = vmul.f32 %v447, %v455
      %v492 = vmul.f32 %v360, %v455
      %v493 = vmul.f32 %v361, %v455
      %v494 = vmul.f32 %v448, %v455
      %v495 = vmul.f32 %v362, %v455
      %v496 = vmul.f32 %v363, %v455
      %v497 = vmul.f32 %v449, %v455
      %v498 = vmul.f32 %v364, %v455
      %v499 = vmul.f32 %v365, %v455
      %v500 = vmul.f32 %v450, %v455
      %v501 = vmul.f32 %v366, %v455
      %v502 = vmul.f32 %v367, %v455
      %v503 = vmul.f32 %v451, %v455
      %vm552 = vcmask 1046528
      %v553 = vrot.slane %v456, 1
      %v554 = vrot.slane %v457, 1
      %v555 = vsel %vm552, %v553, %v554
      %v556 = vrot.slane %v458, 1
      %v557 = vsel %vm552, %v554, %v556
      %v558 = vrot.slane %v459, 1
      %v559 = vrot.slane %v460, 1
      %v560 = vsel %vm552, %v558, %v559
      %v561 = vrot.slane %v461, 1
      %v562 = vsel %vm552, %v559, %v561
      %v563 = vrot.slane %v462, 1
      %v564 = vrot.slane %v463, 1
      %v565 = vsel %vm552, %v563, %v564
      %v566 = vrot.slane %v464, 1
      %v567 = vsel %vm552, %v564, %v566
      %v568 = vrot.slane %v465, 1
      %v569 = vrot.slane %v466, 1
      %v570 = vsel %vm552, %v568, %v569
      %v571 = vrot.slane %v467, 1
      %v572 = vsel %vm552, %v569, %v571
      %v573 = vrot.slane %v468, 1
      %v574 = vrot.slane %v469, 1
      %v575 = vsel %vm552, %v573, %v574
      %v576 = vrot.slane %v470, 1
      %v577 = vsel %vm552, %v574, %v576
      %v578 = vrot.slane %v471, 1
      %v579 = vrot.slane %v472, 1
      %v580 = vsel %vm552, %v578, %v579
      %v581 = vrot.slane %v473, 1
      %v582 = vsel %vm552, %v579, %v581
      %v583 = vrot.slane %v474, 1
      %v584 = vrot.slane %v475, 1
      %v585 = vsel %vm552, %v583, %v584
      %v586 = vrot.slane %v476, 1
      %v587 = vsel %vm552, %v584, %v586
      %v588 = vrot.slane %v477, 1
      %v589 = vrot.slane %v478, 1
      %v590 = vsel %vm552, %v588, %v589
      %v591 = vrot.slane %v479, 1
      %v592 = vsel %vm552, %v589, %v591
      %v593 = vrot.slane %v480, 1
      %v594 = vrot.slane %v481, 1
      %v595 = vsel %vm552, %v593, %v594
      %v596 = vrot.slane %v482, 1
      %v597 = vsel %vm552, %v594, %v596
      %v598 = vrot.slane %v483, 1
      %v599 = vrot.slane %v484, 1
      %v600 = vsel %vm552, %v598, %v599
      %v601 = vrot.slane %v485, 1
      %v602 = vsel %vm552, %v599, %v601
      %v603 = vrot.slane %v486, 1
      %v604 = vrot.slane %v487, 1
      %v605 = vsel %vm552, %v603, %v604
      %v606 = vrot.slane %v488, 1
      %v607 = vsel %vm552, %v604, %v606
      %v608 = vrot.slane %v489, 1
      %v609 = vrot.slane %v490, 1
      %v610 = vsel %vm552, %v608, %v609
      %v611 = vrot.slane %v491, 1
      %v612 = vsel %vm552, %v609, %v611
      %v613 = vrot.slane %v492, 1
      %v614 = vrot.slane %v493, 1
      %v615 = vsel %vm552, %v613, %v614
      %v616 = vrot.slane %v494, 1
      %v617 = vsel %vm552, %v614, %v616
      %v618 = vrot.slane %v495, 1
      %v619 = vrot.slane %v496, 1
      %v620 = vsel %vm552, %v618, %v619
      %v621 = vrot.slane %v497, 1
      %v622 = vsel %vm552, %v619, %v621
      %v623 = vrot.slane %v498, 1
      %v624 = vrot.slane %v499, 1
      %v625 = vsel %vm552, %v623, %v624
      %v626 = vrot.slane %v500, 1
      %v627 = vsel %vm552, %v624, %v626
      %v628 = vrot.slane %v501, 1
      %v629 = vrot.slane %v502, 1
      %v630 = vsel %vm552, %v628, %v629
      %v631 = vrot.slane %v503, 1
      %v632 = vsel %vm552, %v629, %v631
      %v665 = vadd.f32 %v404, %v555
      %v666 = vadd.f32 %v405, %v557
      %v667 = vadd.f32 %v406, %v560
      %v668 = vadd.f32 %v407, %v562
      %v669 = vadd.f32 %v408, %v565
      %v670 = vadd.f32 %v409, %v567
      %v671 = vadd.f32 %v410, %v570
      %v672 = vadd.f32 %v411, %v572
      %v673 = vadd.f32 %v412, %v575
      %v674 = vadd.f32 %v413, %v577
      %v675 = vadd.f32 %v414, %v580
      %v676 = vadd.f32 %v415, %v582
      %v677 = vadd.f32 %v416, %v585
      %v678 = vadd.f32 %v417, %v587
      %v679 = vadd.f32 %v418, %v590
      %v680 = vadd.f32 %v419, %v592
      %v681 = vadd.f32 %v420, %v595
      %v682 = vadd.f32 %v421, %v597
      %v683 = vadd.f32 %v422, %v600
      %v684 = vadd.f32 %v423, %v602
      %v685 = vadd.f32 %v424, %v605
      %v686 = vadd.f32 %v425, %v607
      %v687 = vadd.f32 %v426, %v610
      %v688 = vadd.f32 %v427, %v612
      %v689 = vadd.f32 %v428, %v615
      %v690 = vadd.f32 %v429, %v617
      %v691 = vadd.f32 %v430, %v620
      %v692 = vadd.f32 %v431, %v622
      %v693 = vadd.f32 %v432, %v625
      %v694 = vadd.f32 %v433, %v627
      %v695 = vadd.f32 %v434, %v630
      %v696 = vadd.f32 %v435, %v632
      %v697 = vld [vmem:[%s1] sm:$0x2]
      %v698 = vunpack.c.l.bf16 %v697
      %v699 = vunpack.c.l.bf16 %v316
      %v700 = vunpack.c.l.bf16 %v317
      %v701 = vunpack.c.l.bf16 %v318
      %v702 = vunpack.c.l.bf16 %v319
      %v703 = vunpack.c.l.bf16 %v320
      %v704 = vunpack.c.l.bf16 %v321
      %v705 = vunpack.c.l.bf16 %v322
      %v706 = vunpack.c.l.bf16 %v323
      %v707 = vunpack.c.l.bf16 %v324
      %v708 = vunpack.c.l.bf16 %v325
      %v709 = vunpack.c.l.bf16 %v326
      %v710 = vunpack.c.l.bf16 %v327
      %v711 = vunpack.c.l.bf16 %v328
      %v712 = vunpack.c.l.bf16 %v329
      %v713 = vunpack.c.l.bf16 %v330
      %v714 = vunpack.c.l.bf16 %v331
      %v715 = vlaneseq
      %v716 = vshrl.u32 %v715, 7
      %v717 = vsub.s32 2, %v716
      %v718 = vrot.slane %v698, %v717
      %v719 = vmul.f32 %v699, %v718
      %v720 = vmul.f32 %v337, %v718
      %v721 = vmul.f32 %v436, %v718
      %v722 = vmul.f32 %v700, %v718
      %v723 = vmul.f32 %v339, %v718
      %v724 = vmul.f32 %v437, %v718
      %v725 = vmul.f32 %v701, %v718
      %v726 = vmul.f32 %v341, %v718
      %v727 = vmul.f32 %v438, %v718
      %v728 = vmul.f32 %v702, %v718
      %v729 = vmul.f32 %v343, %v718
      %v730 = vmul.f32 %v439, %v718
      %v731 = vmul.f32 %v703, %v718
      %v732 = vmul.f32 %v345, %v718
      %v733 = vmul.f32 %v440, %v718
      %v734 = vmul.f32 %v704, %v718
      %v735 = vmul.f32 %v347, %v718
      %v736 = vmul.f32 %v441, %v718
      %v737 = vmul.f32 %v705, %v718
      %v738 = vmul.f32 %v349, %v718
      %v739 = vmul.f32 %v442, %v718
      %v740 = vmul.f32 %v706, %v718
      %v741 = vmul.f32 %v351, %v718
      %v742 = vmul.f32 %v443, %v718
      %v743 = vmul.f32 %v707, %v718
      %v744 = vmul.f32 %v353, %v718
      %v745 = vmul.f32 %v444, %v718
      %v746 = vmul.f32 %v708, %v718
      %v747 = vmul.f32 %v355, %v718
      %v748 = vmul.f32 %v445, %v718
      %v749 = vmul.f32 %v709, %v718
      %v750 = vmul.f32 %v357, %v718
      %v751 = vmul.f32 %v446, %v718
      %v752 = vmul.f32 %v710, %v718
      %v753 = vmul.f32 %v359, %v718
      %v754 = vmul.f32 %v447, %v718
      %v755 = vmul.f32 %v711, %v718
      %v756 = vmul.f32 %v361, %v718
      %v757 = vmul.f32 %v448, %v718
      %v758 = vmul.f32 %v712, %v718
      %v759 = vmul.f32 %v363, %v718
      %v760 = vmul.f32 %v449, %v718
      %v761 = vmul.f32 %v713, %v718
      %v762 = vmul.f32 %v365, %v718
      %v763 = vmul.f32 %v450, %v718
      %v764 = vmul.f32 %v714, %v718
      %v765 = vmul.f32 %v367, %v718
      %v766 = vmul.f32 %v451, %v718
      %vm815 = vcmask 1045504
      %v816 = vrot.slane %v719, 2
      %v817 = vrot.slane %v720, 2
      %v818 = vsel %vm815, %v816, %v817
      %v819 = vrot.slane %v721, 2
      %v820 = vsel %vm815, %v817, %v819
      %v821 = vrot.slane %v722, 2
      %v822 = vrot.slane %v723, 2
      %v823 = vsel %vm815, %v821, %v822
      %v824 = vrot.slane %v724, 2
      %v825 = vsel %vm815, %v822, %v824
      %v826 = vrot.slane %v725, 2
      %v827 = vrot.slane %v726, 2
      %v828 = vsel %vm815, %v826, %v827
      %v829 = vrot.slane %v727, 2
      %v830 = vsel %vm815, %v827, %v829
      %v831 = vrot.slane %v728, 2
      %v832 = vrot.slane %v729, 2
      %v833 = vsel %vm815, %v831, %v832
      %v834 = vrot.slane %v730, 2
      %v835 = vsel %vm815, %v832, %v834
      %v836 = vrot.slane %v731, 2
      %v837 = vrot.slane %v732, 2
      %v838 = vsel %vm815, %v836, %v837
      %v839 = vrot.slane %v733, 2
      %v840 = vsel %vm815, %v837, %v839
      %v841 = vrot.slane %v734, 2
      %v842 = vrot.slane %v735, 2
      %v843 = vsel %vm815, %v841, %v842
      %v844 = vrot.slane %v736, 2
      %v845 = vsel %vm815, %v842, %v844
      %v846 = vrot.slane %v737, 2
      %v847 = vrot.slane %v738, 2
      %v848 = vsel %vm815, %v846, %v847
      %v849 = vrot.slane %v739, 2
      %v850 = vsel %vm815, %v847, %v849
      %v851 = vrot.slane %v740, 2
      %v852 = vrot.slane %v741, 2
      %v853 = vsel %vm815, %v851, %v852
      %v854 = vrot.slane %v742, 2
      %v855 = vsel %vm815, %v852, %v854
      %v856 = vrot.slane %v743, 2
      %v857 = vrot.slane %v744, 2
      %v858 = vsel %vm815, %v856, %v857
      %v859 = vrot.slane %v745, 2
      %v860 = vsel %vm815, %v857, %v859
      %v861 = vrot.slane %v746, 2
      %v862 = vrot.slane %v747, 2
      %v863 = vsel %vm815, %v861, %v862
      %v864 = vrot.slane %v748, 2
      %v865 = vsel %vm815, %v862, %v864
      %v866 = vrot.slane %v749, 2
      %v867 = vrot.slane %v750, 2
      %v868 = vsel %vm815, %v866, %v867
      %v869 = vrot.slane %v751, 2
      %v870 = vsel %vm815, %v867, %v869
      %v871 = vrot.slane %v752, 2
      %v872 = vrot.slane %v753, 2
      %v873 = vsel %vm815, %v871, %v872
      %v874 = vrot.slane %v754, 2
      %v875 = vsel %vm815, %v872, %v874
      %v876 = vrot.slane %v755, 2
      %v877 = vrot.slane %v756, 2
      %v878 = vsel %vm815, %v876, %v877
      %v879 = vrot.slane %v757, 2
      %v880 = vsel %vm815, %v877, %v879
      %v881 = vrot.slane %v758, 2
      %v882 = vrot.slane %v759, 2
      %v883 = vsel %vm815, %v881, %v882
      %v884 = vrot.slane %v760, 2
      %v885 = vsel %vm815, %v882, %v884
      %v886 = vrot.slane %v761, 2
      %v887 = vrot.slane %v762, 2
      %v888 = vsel %vm815, %v886, %v887
      %v889 = vrot.slane %v763, 2
      %v890 = vsel %vm815, %v887, %v889
      %v891 = vrot.slane %v764, 2
      %v892 = vrot.slane %v765, 2
      %v893 = vsel %vm815, %v891, %v892
      %v894 = vrot.slane %v766, 2
      %v895 = vsel %vm815, %v892, %v894
      %v928 = vadd.f32 %v665, %v818
      %v929 = vadd.f32 %v666, %v820
      %v930 = vadd.f32 %v667, %v823
      %v931 = vadd.f32 %v668, %v825
      %v932 = vadd.f32 %v669, %v828
      %v933 = vadd.f32 %v670, %v830
      %v934 = vadd.f32 %v671, %v833
      %v935 = vadd.f32 %v672, %v835
      %v936 = vadd.f32 %v673, %v838
      %v937 = vadd.f32 %v674, %v840
      %v938 = vadd.f32 %v675, %v843
      %v939 = vadd.f32 %v676, %v845
      %v940 = vadd.f32 %v677, %v848
      %v941 = vadd.f32 %v678, %v850
      %v942 = vadd.f32 %v679, %v853
      %v943 = vadd.f32 %v680, %v855
      %v944 = vadd.f32 %v681, %v858
      %v945 = vadd.f32 %v682, %v860
      %v946 = vadd.f32 %v683, %v863
      %v947 = vadd.f32 %v684, %v865
      %v948 = vadd.f32 %v685, %v868
      %v949 = vadd.f32 %v686, %v870
      %v950 = vadd.f32 %v687, %v873
      %v951 = vadd.f32 %v688, %v875
      %v952 = vadd.f32 %v689, %v878
      %v953 = vadd.f32 %v690, %v880
      %v954 = vadd.f32 %v691, %v883
      %v955 = vadd.f32 %v692, %v885
      %v956 = vadd.f32 %v693, %v888
      %v957 = vadd.f32 %v694, %v890
      %v958 = vadd.f32 %v695, %v893
      %v959 = vadd.f32 %v696, %v895
      %v960 = vunpack.c.l.bf16 %v294
      %v961 = vunpack.c.l.bf16 %v295
      %v962 = vlaneseq
      %v963 = vshrl.u32 %v962, 7
      %v964 = vsub.s32 3, %v963
      %v965 = vrot.slane %v698, %v964
      %v966 = vmul.f32 %v338, %v965
      %v967 = vmul.f32 %v339, %v965
      %v968 = vmul.f32 %v340, %v965
      %v969 = vmul.f32 %v341, %v965
      %v970 = vmul.f32 %v342, %v965
      %v971 = vmul.f32 %v343, %v965
      %v972 = vmul.f32 %v344, %v965
      %v973 = vmul.f32 %v345, %v965
      %v974 = vmul.f32 %v346, %v965
      %v975 = vmul.f32 %v347, %v965
      %v976 = vmul.f32 %v348, %v965
      %v977 = vmul.f32 %v349, %v965
      %v978 = vmul.f32 %v350, %v965
      %v979 = vmul.f32 %v351, %v965
      %v980 = vmul.f32 %v352, %v965
      %v981 = vmul.f32 %v353, %v965
      %v982 = vmul.f32 %v354, %v965
      %v983 = vmul.f32 %v355, %v965
      %v984 = vmul.f32 %v356, %v965
      %v985 = vmul.f32 %v357, %v965
      %v986 = vmul.f32 %v358, %v965
      %v987 = vmul.f32 %v359, %v965
      %v988 = vmul.f32 %v360, %v965
      %v989 = vmul.f32 %v361, %v965
      %v990 = vmul.f32 %v362, %v965
      %v991 = vmul.f32 %v363, %v965
      %v992 = vmul.f32 %v364, %v965
      %v993 = vmul.f32 %v365, %v965
      %v994 = vmul.f32 %v366, %v965
      %v995 = vmul.f32 %v367, %v965
      %v996 = vmul.f32 %v960, %v965
      %v997 = vmul.f32 %v961, %v965
      %v998 = vadd.f32 %v928, %v966
      %v999 = vadd.f32 %v929, %v967
      %v1000 = vadd.f32 %v930, %v968
      %v1001 = vadd.f32 %v931, %v969
      %v1002 = vadd.f32 %v932, %v970
      %v1003 = vadd.f32 %v933, %v971
      %v1004 = vadd.f32 %v934, %v972
      %v1005 = vadd.f32 %v935, %v973
      %v1006 = vadd.f32 %v936, %v974
      %v1007 = vadd.f32 %v937, %v975
      %v1008 = vadd.f32 %v938, %v976
      %v1009 = vadd.f32 %v939, %v977
      %v1010 = vadd.f32 %v940, %v978
      %v1011 = vadd.f32 %v941, %v979
      %v1012 = vadd.f32 %v942, %v980
      %v1013 = vadd.f32 %v943, %v981
      %v1014 = vadd.f32 %v944, %v982
      %v1015 = vadd.f32 %v945, %v983
      %v1016 = vadd.f32 %v946, %v984
      %v1017 = vadd.f32 %v947, %v985
      %v1018 = vadd.f32 %v948, %v986
      %v1019 = vadd.f32 %v949, %v987
      %v1020 = vadd.f32 %v950, %v988
      %v1021 = vadd.f32 %v951, %v989
      %v1022 = vadd.f32 %v952, %v990
      %v1023 = vadd.f32 %v953, %v991
      %v1024 = vadd.f32 %v954, %v992
      %v1025 = vadd.f32 %v955, %v993
      %v1026 = vadd.f32 %v956, %v994
      %v1027 = vadd.f32 %v957, %v995
      %v1028 = vadd.f32 %v958, %v996
      %v1029 = vadd.f32 %v959, %v997
      %v1030 = vld [vmem:[%s1] sm:$0x4]
      %v1031 = vunpack.c.l.bf16 %v1030
      %v1032 = vunpack.c.l.bf16 %v314
      %v1033 = vlaneseq
      %v1034 = vshrl.u32 %v1033, 7
      %v1035 = vsub.s32 4, %v1034
      %v1036 = vrot.slane %v1031, %v1035
      %v1037 = vmul.f32 %v338, %v1036
      %v1038 = vmul.f32 %v339, %v1036
      %v1039 = vmul.f32 %v437, %v1036
      %v1040 = vmul.f32 %v340, %v1036
      %v1041 = vmul.f32 %v341, %v1036
      %v1042 = vmul.f32 %v438, %v1036
      %v1043 = vmul.f32 %v342, %v1036
      %v1044 = vmul.f32 %v343, %v1036
      %v1045 = vmul.f32 %v439, %v1036
      %v1046 = vmul.f32 %v344, %v1036
      %v1047 = vmul.f32 %v345, %v1036
      %v1048 = vmul.f32 %v440, %v1036
      %v1049 = vmul.f32 %v346, %v1036
      %v1050 = vmul.f32 %v347, %v1036
      %v1051 = vmul.f32 %v441, %v1036
      %v1052 = vmul.f32 %v348, %v1036
      %v1053 = vmul.f32 %v349, %v1036
      %v1054 = vmul.f32 %v442, %v1036
      %v1055 = vmul.f32 %v350, %v1036
      %v1056 = vmul.f32 %v351, %v1036
      %v1057 = vmul.f32 %v443, %v1036
      %v1058 = vmul.f32 %v352, %v1036
      %v1059 = vmul.f32 %v353, %v1036
      %v1060 = vmul.f32 %v444, %v1036
      %v1061 = vmul.f32 %v354, %v1036
      %v1062 = vmul.f32 %v355, %v1036
      %v1063 = vmul.f32 %v445, %v1036
      %v1064 = vmul.f32 %v356, %v1036
      %v1065 = vmul.f32 %v357, %v1036
      %v1066 = vmul.f32 %v446, %v1036
      %v1067 = vmul.f32 %v358, %v1036
      %v1068 = vmul.f32 %v359, %v1036
      %v1069 = vmul.f32 %v447, %v1036
      %v1070 = vmul.f32 %v360, %v1036
      %v1071 = vmul.f32 %v361, %v1036
      %v1072 = vmul.f32 %v448, %v1036
      %v1073 = vmul.f32 %v362, %v1036
      %v1074 = vmul.f32 %v363, %v1036
      %v1075 = vmul.f32 %v449, %v1036
      %v1076 = vmul.f32 %v364, %v1036
      %v1077 = vmul.f32 %v365, %v1036
      %v1078 = vmul.f32 %v450, %v1036
      %v1079 = vmul.f32 %v366, %v1036
      %v1080 = vmul.f32 %v367, %v1036
      %v1081 = vmul.f32 %v451, %v1036
      %v1082 = vmul.f32 %v960, %v1036
      %v1083 = vmul.f32 %v961, %v1036
      %v1084 = vmul.f32 %v1032, %v1036
      %v1133 = vrot.slane %v1037, 1
      %v1134 = vrot.slane %v1038, 1
      %v1135 = vsel %vm552, %v1133, %v1134
      %v1136 = vrot.slane %v1039, 1
      %v1137 = vsel %vm552, %v1134, %v1136
      %v1138 = vrot.slane %v1040, 1
      %v1139 = vrot.slane %v1041, 1
      %v1140 = vsel %vm552, %v1138, %v1139
      %v1141 = vrot.slane %v1042, 1
      %v1142 = vsel %vm552, %v1139, %v1141
      %v1143 = vrot.slane %v1043, 1
      %v1144 = vrot.slane %v1044, 1
      %v1145 = vsel %vm552, %v1143, %v1144
      %v1146 = vrot.slane %v1045, 1
      %v1147 = vsel %vm552, %v1144, %v1146
      %v1148 = vrot.slane %v1046, 1
      %v1149 = vrot.slane %v1047, 1
      %v1150 = vsel %vm552, %v1148, %v1149
      %v1151 = vrot.slane %v1048, 1
      %v1152 = vsel %vm552, %v1149, %v1151
      %v1153 = vrot.slane %v1049, 1
      %v1154 = vrot.slane %v1050, 1
      %v1155 = vsel %vm552, %v1153, %v1154
      %v1156 = vrot.slane %v1051, 1
      %v1157 = vsel %vm552, %v1154, %v1156
      %v1158 = vrot.slane %v1052, 1
      %v1159 = vrot.slane %v1053, 1
      %v1160 = vsel %vm552, %v1158, %v1159
      %v1161 = vrot.slane %v1054, 1
      %v1162 = vsel %vm552, %v1159, %v1161
      %v1163 = vrot.slane %v1055, 1
      %v1164 = vrot.slane %v1056, 1
      %v1165 = vsel %vm552, %v1163, %v1164
      %v1166 = vrot.slane %v1057, 1
      %v1167 = vsel %vm552, %v1164, %v1166
      %v1168 = vrot.slane %v1058, 1
      %v1169 = vrot.slane %v1059, 1
      %v1170 = vsel %vm552, %v1168, %v1169
      %v1171 = vrot.slane %v1060, 1
      %v1172 = vsel %vm552, %v1169, %v1171
      %v1173 = vrot.slane %v1061, 1
      %v1174 = vrot.slane %v1062, 1
      %v1175 = vsel %vm552, %v1173, %v1174
      %v1176 = vrot.slane %v1063, 1
      %v1177 = vsel %vm552, %v1174, %v1176
      %v1178 = vrot.slane %v1064, 1
      %v1179 = vrot.slane %v1065, 1
      %v1180 = vsel %vm552, %v1178, %v1179
      %v1181 = vrot.slane %v1066, 1
      %v1182 = vsel %vm552, %v1179, %v1181
      %v1183 = vrot.slane %v1067, 1
      %v1184 = vrot.slane %v1068, 1
      %v1185 = vsel %vm552, %v1183, %v1184
      %v1186 = vrot.slane %v1069, 1
      %v1187 = vsel %vm552, %v1184, %v1186
      %v1188 = vrot.slane %v1070, 1
      %v1189 = vrot.slane %v1071, 1
      %v1190 = vsel %vm552, %v1188, %v1189
      %v1191 = vrot.slane %v1072, 1
      %v1192 = vsel %vm552, %v1189, %v1191
      %v1193 = vrot.slane %v1073, 1
      %v1194 = vrot.slane %v1074, 1
      %v1195 = vsel %vm552, %v1193, %v1194
      %v1196 = vrot.slane %v1075, 1
      %v1197 = vsel %vm552, %v1194, %v1196
      %v1198 = vrot.slane %v1076, 1
      %v1199 = vrot.slane %v1077, 1
      %v1200 = vsel %vm552, %v1198, %v1199
      %v1201 = vrot.slane %v1078, 1
      %v1202 = vsel %vm552, %v1199, %v1201
      %v1203 = vrot.slane %v1079, 1
      %v1204 = vrot.slane %v1080, 1
      %v1205 = vsel %vm552, %v1203, %v1204
      %v1206 = vrot.slane %v1081, 1
      %v1207 = vsel %vm552, %v1204, %v1206
      %v1208 = vrot.slane %v1082, 1
      %v1209 = vrot.slane %v1083, 1
      %v1210 = vsel %vm552, %v1208, %v1209
      %v1211 = vrot.slane %v1084, 1
      %v1212 = vsel %vm552, %v1209, %v1211
      %v1245 = vadd.f32 %v998, %v1135
      %v1246 = vadd.f32 %v999, %v1137
      %v1247 = vadd.f32 %v1000, %v1140
      %v1248 = vadd.f32 %v1001, %v1142
      %v1249 = vadd.f32 %v1002, %v1145
      %v1250 = vadd.f32 %v1003, %v1147
      %v1251 = vadd.f32 %v1004, %v1150
      %v1252 = vadd.f32 %v1005, %v1152
      %v1253 = vadd.f32 %v1006, %v1155
      %v1254 = vadd.f32 %v1007, %v1157
      %v1255 = vadd.f32 %v1008, %v1160
      %v1256 = vadd.f32 %v1009, %v1162
      %v1257 = vadd.f32 %v1010, %v1165
      %v1258 = vadd.f32 %v1011, %v1167
      %v1259 = vadd.f32 %v1012, %v1170
      %v1260 = vadd.f32 %v1013, %v1172
      %v1261 = vadd.f32 %v1014, %v1175
      %v1262 = vadd.f32 %v1015, %v1177
      %v1263 = vadd.f32 %v1016, %v1180
      %v1264 = vadd.f32 %v1017, %v1182
      %v1265 = vadd.f32 %v1018, %v1185
      %v1266 = vadd.f32 %v1019, %v1187
      %v1267 = vadd.f32 %v1020, %v1190
      %v1268 = vadd.f32 %v1021, %v1192
      %v1269 = vadd.f32 %v1022, %v1195
      %v1270 = vadd.f32 %v1023, %v1197
      %v1271 = vadd.f32 %v1024, %v1200
      %v1272 = vadd.f32 %v1025, %v1202
      %v1273 = vadd.f32 %v1026, %v1205
      %v1274 = vadd.f32 %v1027, %v1207
      %v1275 = vadd.f32 %v1028, %v1210
      %v1276 = vadd.f32 %v1029, %v1212
      %v1277 = vunpack.c.l.bf16 %v332
      %v1278 = vlaneseq
      %v1279 = vshrl.u32 %v1278, 7
      %v1280 = vsub.s32 5, %v1279
      %v1281 = vrot.slane %v1031, %v1280
      %v1282 = vmul.f32 %v700, %v1281
      %v1283 = vmul.f32 %v339, %v1281
      %v1284 = vmul.f32 %v437, %v1281
      %v1285 = vmul.f32 %v701, %v1281
      %v1286 = vmul.f32 %v341, %v1281
      %v1287 = vmul.f32 %v438, %v1281
      %v1288 = vmul.f32 %v702, %v1281
      %v1289 = vmul.f32 %v343, %v1281
      %v1290 = vmul.f32 %v439, %v1281
      %v1291 = vmul.f32 %v703, %v1281
      %v1292 = vmul.f32 %v345, %v1281
      %v1293 = vmul.f32 %v440, %v1281
      %v1294 = vmul.f32 %v704, %v1281
      %v1295 = vmul.f32 %v347, %v1281
      %v1296 = vmul.f32 %v441, %v1281
      %v1297 = vmul.f32 %v705, %v1281
      %v1298 = vmul.f32 %v349, %v1281
      %v1299 = vmul.f32 %v442, %v1281
      %v1300 = vmul.f32 %v706, %v1281
      %v1301 = vmul.f32 %v351, %v1281
      %v1302 = vmul.f32 %v443, %v1281
      %v1303 = vmul.f32 %v707, %v1281
      %v1304 = vmul.f32 %v353, %v1281
      %v1305 = vmul.f32 %v444, %v1281
      %v1306 = vmul.f32 %v708, %v1281
      %v1307 = vmul.f32 %v355, %v1281
      %v1308 = vmul.f32 %v445, %v1281
      %v1309 = vmul.f32 %v709, %v1281
      %v1310 = vmul.f32 %v357, %v1281
      %v1311 = vmul.f32 %v446, %v1281
      %v1312 = vmul.f32 %v710, %v1281
      %v1313 = vmul.f32 %v359, %v1281
      %v1314 = vmul.f32 %v447, %v1281
      %v1315 = vmul.f32 %v711, %v1281
      %v1316 = vmul.f32 %v361, %v1281
      %v1317 = vmul.f32 %v448, %v1281
      %v1318 = vmul.f32 %v712, %v1281
      %v1319 = vmul.f32 %v363, %v1281
      %v1320 = vmul.f32 %v449, %v1281
      %v1321 = vmul.f32 %v713, %v1281
      %v1322 = vmul.f32 %v365, %v1281
      %v1323 = vmul.f32 %v450, %v1281
      %v1324 = vmul.f32 %v714, %v1281
      %v1325 = vmul.f32 %v367, %v1281
      %v1326 = vmul.f32 %v451, %v1281
      %v1327 = vmul.f32 %v1277, %v1281
      %v1328 = vmul.f32 %v961, %v1281
      %v1329 = vmul.f32 %v1032, %v1281
      %v1378 = vrot.slane %v1282, 2
      %v1379 = vrot.slane %v1283, 2
      %v1380 = vsel %vm815, %v1378, %v1379
      %v1381 = vrot.slane %v1284, 2
      %v1382 = vsel %vm815, %v1379, %v1381
      %v1383 = vrot.slane %v1285, 2
      %v1384 = vrot.slane %v1286, 2
      %v1385 = vsel %vm815, %v1383, %v1384
      %v1386 = vrot.slane %v1287, 2
      %v1387 = vsel %vm815, %v1384, %v1386
      %v1388 = vrot.slane %v1288, 2
      %v1389 = vrot.slane %v1289, 2
      %v1390 = vsel %vm815, %v1388, %v1389
      %v1391 = vrot.slane %v1290, 2
      %v1392 = vsel %vm815, %v1389, %v1391
      %v1393 = vrot.slane %v1291, 2
      %v1394 = vrot.slane %v1292, 2
      %v1395 = vsel %vm815, %v1393, %v1394
      %v1396 = vrot.slane %v1293, 2
      %v1397 = vsel %vm815, %v1394, %v1396
      %v1398 = vrot.slane %v1294, 2
      %v1399 = vrot.slane %v1295, 2
      %v1400 = vsel %vm815, %v1398, %v1399
      %v1401 = vrot.slane %v1296, 2
      %v1402 = vsel %vm815, %v1399, %v1401
      %v1403 = vrot.slane %v1297, 2
      %v1404 = vrot.slane %v1298, 2
      %v1405 = vsel %vm815, %v1403, %v1404
      %v1406 = vrot.slane %v1299, 2
      %v1407 = vsel %vm815, %v1404, %v1406
      %v1408 = vrot.slane %v1300, 2
      %v1409 = vrot.slane %v1301, 2
      %v1410 = vsel %vm815, %v1408, %v1409
      %v1411 = vrot.slane %v1302, 2
      %v1412 = vsel %vm815, %v1409, %v1411
      %v1413 = vrot.slane %v1303, 2
      %v1414 = vrot.slane %v1304, 2
      %v1415 = vsel %vm815, %v1413, %v1414
      %v1416 = vrot.slane %v1305, 2
      %v1417 = vsel %vm815, %v1414, %v1416
      %v1418 = vrot.slane %v1306, 2
      %v1419 = vrot.slane %v1307, 2
      %v1420 = vsel %vm815, %v1418, %v1419
      %v1421 = vrot.slane %v1308, 2
      %v1422 = vsel %vm815, %v1419, %v1421
      %v1423 = vrot.slane %v1309, 2
      %v1424 = vrot.slane %v1310, 2
      %v1425 = vsel %vm815, %v1423, %v1424
      %v1426 = vrot.slane %v1311, 2
      %v1427 = vsel %vm815, %v1424, %v1426
      %v1428 = vrot.slane %v1312, 2
      %v1429 = vrot.slane %v1313, 2
      %v1430 = vsel %vm815, %v1428, %v1429
      %v1431 = vrot.slane %v1314, 2
      %v1432 = vsel %vm815, %v1429, %v1431
      %v1433 = vrot.slane %v1315, 2
      %v1434 = vrot.slane %v1316, 2
      %v1435 = vsel %vm815, %v1433, %v1434
      %v1436 = vrot.slane %v1317, 2
      %v1437 = vsel %vm815, %v1434, %v1436
      %v1438 = vrot.slane %v1318, 2
      %v1439 = vrot.slane %v1319, 2
      %v1440 = vsel %vm815, %v1438, %v1439
      %v1441 = vrot.slane %v1320, 2
      %v1442 = vsel %vm815, %v1439, %v1441
      %v1443 = vrot.slane %v1321, 2
      %v1444 = vrot.slane %v1322, 2
      %v1445 = vsel %vm815, %v1443, %v1444
      %v1446 = vrot.slane %v1323, 2
      %v1447 = vsel %vm815, %v1444, %v1446
      %v1448 = vrot.slane %v1324, 2
      %v1449 = vrot.slane %v1325, 2
      %v1450 = vsel %vm815, %v1448, %v1449
      %v1451 = vrot.slane %v1326, 2
      %v1452 = vsel %vm815, %v1449, %v1451
      %v1453 = vrot.slane %v1327, 2
      %v1454 = vrot.slane %v1328, 2
      %v1455 = vsel %vm815, %v1453, %v1454
      %v1456 = vrot.slane %v1329, 2
      %v1457 = vsel %vm815, %v1454, %v1456
      %v1490 = vadd.f32 %v1245, %v1380
      %v1491 = vadd.f32 %v1246, %v1382
      %v1492 = vadd.f32 %v1247, %v1385
      %v1493 = vadd.f32 %v1248, %v1387
      %v1494 = vadd.f32 %v1249, %v1390
      %v1495 = vadd.f32 %v1250, %v1392
      %v1496 = vadd.f32 %v1251, %v1395
      %v1497 = vadd.f32 %v1252, %v1397
      %v1498 = vadd.f32 %v1253, %v1400
      %v1499 = vadd.f32 %v1254, %v1402
      %v1500 = vadd.f32 %v1255, %v1405
      %v1501 = vadd.f32 %v1256, %v1407
      %v1502 = vadd.f32 %v1257, %v1410
      %v1503 = vadd.f32 %v1258, %v1412
      %v1504 = vadd.f32 %v1259, %v1415
      %v1505 = vadd.f32 %v1260, %v1417
      %v1506 = vadd.f32 %v1261, %v1420
      %v1507 = vadd.f32 %v1262, %v1422
      %v1508 = vadd.f32 %v1263, %v1425
      %v1509 = vadd.f32 %v1264, %v1427
      %v1510 = vadd.f32 %v1265, %v1430
      %v1511 = vadd.f32 %v1266, %v1432
      %v1512 = vadd.f32 %v1267, %v1435
      %v1513 = vadd.f32 %v1268, %v1437
      %v1514 = vadd.f32 %v1269, %v1440
      %v1515 = vadd.f32 %v1270, %v1442
      %v1516 = vadd.f32 %v1271, %v1445
      %v1517 = vadd.f32 %v1272, %v1447
      %v1518 = vadd.f32 %v1273, %v1450
      %v1519 = vadd.f32 %v1274, %v1452
      %v1520 = vadd.f32 %v1275, %v1455
      %v1521 = vadd.f32 %v1276, %v1457
      %v1522 = vld [vmem:[%s1] sm:$0x8]
      %v1523 = vunpack.c.l.bf16 %v1522
      %v1524 = vunpack.c.l.bf16 %v296
      %v1525 = vunpack.c.l.bf16 %v297
      %v1526 = vlaneseq
      %v1527 = vshrl.u32 %v1526, 7
      %v1528 = vsub.s32 6, %v1527
      %v1529 = vrot.slane %v1523, %v1528
      %v1530 = vmul.f32 %v340, %v1529
      %v1531 = vmul.f32 %v341, %v1529
      %v1532 = vmul.f32 %v342, %v1529
      %v1533 = vmul.f32 %v343, %v1529
      %v1534 = vmul.f32 %v344, %v1529
      %v1535 = vmul.f32 %v345, %v1529
      %v1536 = vmul.f32 %v346, %v1529
      %v1537 = vmul.f32 %v347, %v1529
      %v1538 = vmul.f32 %v348, %v1529
      %v1539 = vmul.f32 %v349, %v1529
      %v1540 = vmul.f32 %v350, %v1529
      %v1541 = vmul.f32 %v351, %v1529
      %v1542 = vmul.f32 %v352, %v1529
      %v1543 = vmul.f32 %v353, %v1529
      %v1544 = vmul.f32 %v354, %v1529
      %v1545 = vmul.f32 %v355, %v1529
      %v1546 = vmul.f32 %v356, %v1529
      %v1547 = vmul.f32 %v357, %v1529
      %v1548 = vmul.f32 %v358, %v1529
      %v1549 = vmul.f32 %v359, %v1529
      %v1550 = vmul.f32 %v360, %v1529
      %v1551 = vmul.f32 %v361, %v1529
      %v1552 = vmul.f32 %v362, %v1529
      %v1553 = vmul.f32 %v363, %v1529
      %v1554 = vmul.f32 %v364, %v1529
      %v1555 = vmul.f32 %v365, %v1529
      %v1556 = vmul.f32 %v366, %v1529
      %v1557 = vmul.f32 %v367, %v1529
      %v1558 = vmul.f32 %v960, %v1529
      %v1559 = vmul.f32 %v961, %v1529
      %v1560 = vmul.f32 %v1524, %v1529
      %v1561 = vmul.f32 %v1525, %v1529
      %v1562 = vadd.f32 %v1490, %v1530
      %v1563 = vadd.f32 %v1491, %v1531
      %v1564 = vadd.f32 %v1492, %v1532
      %v1565 = vadd.f32 %v1493, %v1533
      %v1566 = vadd.f32 %v1494, %v1534
      %v1567 = vadd.f32 %v1495, %v1535
      %v1568 = vadd.f32 %v1496, %v1536
      %v1569 = vadd.f32 %v1497, %v1537
      %v1570 = vadd.f32 %v1498, %v1538
      %v1571 = vadd.f32 %v1499, %v1539
      %v1572 = vadd.f32 %v1500, %v1540
      %v1573 = vadd.f32 %v1501, %v1541
      %v1574 = vadd.f32 %v1502, %v1542
      %v1575 = vadd.f32 %v1503, %v1543
      %v1576 = vadd.f32 %v1504, %v1544
      %v1577 = vadd.f32 %v1505, %v1545
      %v1578 = vadd.f32 %v1506, %v1546
      %v1579 = vadd.f32 %v1507, %v1547
      %v1580 = vadd.f32 %v1508, %v1548
      %v1581 = vadd.f32 %v1509, %v1549
      %v1582 = vadd.f32 %v1510, %v1550
      %v1583 = vadd.f32 %v1511, %v1551
      %v1584 = vadd.f32 %v1512, %v1552
      %v1585 = vadd.f32 %v1513, %v1553
      %v1586 = vadd.f32 %v1514, %v1554
      %v1587 = vadd.f32 %v1515, %v1555
      %v1588 = vadd.f32 %v1516, %v1556
      %v1589 = vadd.f32 %v1517, %v1557
      %v1590 = vadd.f32 %v1518, %v1558
      %v1591 = vadd.f32 %v1519, %v1559
      %v1592 = vadd.f32 %v1520, %v1560
      %v1593 = vadd.f32 %v1521, %v1561
      %v1594 = vunpack.c.l.bf16 %v315
      %v1595 = vlaneseq
      %v1596 = vshrl.u32 %v1595, 7
      %v1597 = vsub.s32 7, %v1596
      %v1598 = vrot.slane %v1523, %v1597
      %v1599 = vmul.f32 %v340, %v1598
      %v1600 = vmul.f32 %v341, %v1598
      %v1601 = vmul.f32 %v438, %v1598
      %v1602 = vmul.f32 %v342, %v1598
      %v1603 = vmul.f32 %v343, %v1598
      %v1604 = vmul.f32 %v439, %v1598
      %v1605 = vmul.f32 %v344, %v1598
      %v1606 = vmul.f32 %v345, %v1598
      %v1607 = vmul.f32 %v440, %v1598
      %v1608 = vmul.f32 %v346, %v1598
      %v1609 = vmul.f32 %v347, %v1598
      %v1610 = vmul.f32 %v441, %v1598
      %v1611 = vmul.f32 %v348, %v1598
      %v1612 = vmul.f32 %v349, %v1598
      %v1613 = vmul.f32 %v442, %v1598
      %v1614 = vmul.f32 %v350, %v1598
      %v1615 = vmul.f32 %v351, %v1598
      %v1616 = vmul.f32 %v443, %v1598
      %v1617 = vmul.f32 %v352, %v1598
      %v1618 = vmul.f32 %v353, %v1598
      %v1619 = vmul.f32 %v444, %v1598
      %v1620 = vmul.f32 %v354, %v1598
      %v1621 = vmul.f32 %v355, %v1598
      %v1622 = vmul.f32 %v445, %v1598
      %v1623 = vmul.f32 %v356, %v1598
      %v1624 = vmul.f32 %v357, %v1598
      %v1625 = vmul.f32 %v446, %v1598
      %v1626 = vmul.f32 %v358, %v1598
      %v1627 = vmul.f32 %v359, %v1598
      %v1628 = vmul.f32 %v447, %v1598
      %v1629 = vmul.f32 %v360, %v1598
      %v1630 = vmul.f32 %v361, %v1598
      %v1631 = vmul.f32 %v448, %v1598
      %v1632 = vmul.f32 %v362, %v1598
      %v1633 = vmul.f32 %v363, %v1598
      %v1634 = vmul.f32 %v449, %v1598
      %v1635 = vmul.f32 %v364, %v1598
      %v1636 = vmul.f32 %v365, %v1598
      %v1637 = vmul.f32 %v450, %v1598
      %v1638 = vmul.f32 %v366, %v1598
      %v1639 = vmul.f32 %v367, %v1598
      %v1640 = vmul.f32 %v451, %v1598
      %v1641 = vmul.f32 %v960, %v1598
      %v1642 = vmul.f32 %v961, %v1598
      %v1643 = vmul.f32 %v1032, %v1598
      %v1644 = vmul.f32 %v1524, %v1598
      %v1645 = vmul.f32 %v1525, %v1598
      %v1646 = vmul.f32 %v1594, %v1598
      %v1695 = vrot.slane %v1599, 1
      %v1696 = vrot.slane %v1600, 1
      %v1697 = vsel %vm552, %v1695, %v1696
      %v1698 = vrot.slane %v1601, 1
      %v1699 = vsel %vm552, %v1696, %v1698
      %v1700 = vrot.slane %v1602, 1
      %v1701 = vrot.slane %v1603, 1
      %v1702 = vsel %vm552, %v1700, %v1701
      %v1703 = vrot.slane %v1604, 1
      %v1704 = vsel %vm552, %v1701, %v1703
      %v1705 = vrot.slane %v1605, 1
      %v1706 = vrot.slane %v1606, 1
      %v1707 = vsel %vm552, %v1705, %v1706
      %v1708 = vrot.slane %v1607, 1
      %v1709 = vsel %vm552, %v1706, %v1708
      %v1710 = vrot.slane %v1608, 1
      %v1711 = vrot.slane %v1609, 1
      %v1712 = vsel %vm552, %v1710, %v1711
      %v1713 = vrot.slane %v1610, 1
      %v1714 = vsel %vm552, %v1711, %v1713
      %v1715 = vrot.slane %v1611, 1
      %v1716 = vrot.slane %v1612, 1
      %v1717 = vsel %vm552, %v1715, %v1716
      %v1718 = vrot.slane %v1613, 1
      %v1719 = vsel %vm552, %v1716, %v1718
      %v1720 = vrot.slane %v1614, 1
      %v1721 = vrot.slane %v1615, 1
      %v1722 = vsel %vm552, %v1720, %v1721
      %v1723 = vrot.slane %v1616, 1
      %v1724 = vsel %vm552, %v1721, %v1723
      %v1725 = vrot.slane %v1617, 1
      %v1726 = vrot.slane %v1618, 1
      %v1727 = vsel %vm552, %v1725, %v1726
      %v1728 = vrot.slane %v1619, 1
      %v1729 = vsel %vm552, %v1726, %v1728
      %v1730 = vrot.slane %v1620, 1
      %v1731 = vrot.slane %v1621, 1
      %v1732 = vsel %vm552, %v1730, %v1731
      %v1733 = vrot.slane %v1622, 1
      %v1734 = vsel %vm552, %v1731, %v1733
      %v1735 = vrot.slane %v1623, 1
      %v1736 = vrot.slane %v1624, 1
      %v1737 = vsel %vm552, %v1735, %v1736
      %v1738 = vrot.slane %v1625, 1
      %v1739 = vsel %vm552, %v1736, %v1738
      %v1740 = vrot.slane %v1626, 1
      %v1741 = vrot.slane %v1627, 1
      %v1742 = vsel %vm552, %v1740, %v1741
      %v1743 = vrot.slane %v1628, 1
      %v1744 = vsel %vm552, %v1741, %v1743
      %v1745 = vrot.slane %v1629, 1
      %v1746 = vrot.slane %v1630, 1
      %v1747 = vsel %vm552, %v1745, %v1746
      %v1748 = vrot.slane %v1631, 1
      %v1749 = vsel %vm552, %v1746, %v1748
      %v1750 = vrot.slane %v1632, 1
      %v1751 = vrot.slane %v1633, 1
      %v1752 = vsel %vm552, %v1750, %v1751
      %v1753 = vrot.slane %v1634, 1
      %v1754 = vsel %vm552, %v1751, %v1753
      %v1755 = vrot.slane %v1635, 1
      %v1756 = vrot.slane %v1636, 1
      %v1757 = vsel %vm552, %v1755, %v1756
      %v1758 = vrot.slane %v1637, 1
      %v1759 = vsel %vm552, %v1756, %v1758
      %v1760 = vrot.slane %v1638, 1
      %v1761 = vrot.slane %v1639, 1
      %v1762 = vsel %vm552, %v1760, %v1761
      %v1763 = vrot.slane %v1640, 1
      %v1764 = vsel %vm552, %v1761, %v1763
      %v1765 = vrot.slane %v1641, 1
      %v1766 = vrot.slane %v1642, 1
      %v1767 = vsel %vm552, %v1765, %v1766
      %v1768 = vrot.slane %v1643, 1
      %v1769 = vsel %vm552, %v1766, %v1768
      %v1770 = vrot.slane %v1644, 1
      %v1771 = vrot.slane %v1645, 1
      %v1772 = vsel %vm552, %v1770, %v1771
      %v1773 = vrot.slane %v1646, 1
      %v1774 = vsel %vm552, %v1771, %v1773
      %v1807 = vadd.f32 %v1562, %v1697
      %v1808 = vadd.f32 %v1563, %v1699
      %v1809 = vadd.f32 %v1564, %v1702
      %v1810 = vadd.f32 %v1565, %v1704
      %v1811 = vadd.f32 %v1566, %v1707
      %v1812 = vadd.f32 %v1567, %v1709
      %v1813 = vadd.f32 %v1568, %v1712
      %v1814 = vadd.f32 %v1569, %v1714
      %v1815 = vadd.f32 %v1570, %v1717
      %v1816 = vadd.f32 %v1571, %v1719
      %v1817 = vadd.f32 %v1572, %v1722
      %v1818 = vadd.f32 %v1573, %v1724
      %v1819 = vadd.f32 %v1574, %v1727
      %v1820 = vadd.f32 %v1575, %v1729
      %v1821 = vadd.f32 %v1576, %v1732
      %v1822 = vadd.f32 %v1577, %v1734
      %v1823 = vadd.f32 %v1578, %v1737
      %v1824 = vadd.f32 %v1579, %v1739
      %v1825 = vadd.f32 %v1580, %v1742
      %v1826 = vadd.f32 %v1581, %v1744
      %v1827 = vadd.f32 %v1582, %v1747
      %v1828 = vadd.f32 %v1583, %v1749
      %v1829 = vadd.f32 %v1584, %v1752
      %v1830 = vadd.f32 %v1585, %v1754
      %v1831 = vadd.f32 %v1586, %v1757
      %v1832 = vadd.f32 %v1587, %v1759
      %v1833 = vadd.f32 %v1588, %v1762
      %v1834 = vadd.f32 %v1589, %v1764
      %v1835 = vadd.f32 %v1590, %v1767
      %v1836 = vadd.f32 %v1591, %v1769
      %v1837 = vadd.f32 %v1592, %v1772
      %v1838 = vadd.f32 %v1593, %v1774
      %v1839 = vld [vmem:[%s1 + $0x4] sm:$0x1]
      %v1840 = vunpack.c.l.bf16 %v1839
      %v1841 = vunpack.c.l.bf16 %v333
      %v1842 = vlaneseq
      %v1843 = vshrl.u32 %v1842, 7
      %v1844 = vsub.s32 0, %v1843
      %v1845 = vrot.slane %v1840, %v1844
      %v1846 = vmul.f32 %v701, %v1845
      %v1847 = vmul.f32 %v341, %v1845
      %v1848 = vmul.f32 %v438, %v1845
      %v1849 = vmul.f32 %v702, %v1845
      %v1850 = vmul.f32 %v343, %v1845
      %v1851 = vmul.f32 %v439, %v1845
      %v1852 = vmul.f32 %v703, %v1845
      %v1853 = vmul.f32 %v345, %v1845
      %v1854 = vmul.f32 %v440, %v1845
      %v1855 = vmul.f32 %v704, %v1845
      %v1856 = vmul.f32 %v347, %v1845
      %v1857 = vmul.f32 %v441, %v1845
      %v1858 = vmul.f32 %v705, %v1845
      %v1859 = vmul.f32 %v349, %v1845
      %v1860 = vmul.f32 %v442, %v1845
      %v1861 = vmul.f32 %v706, %v1845
      %v1862 = vmul.f32 %v351, %v1845
      %v1863 = vmul.f32 %v443, %v1845
      %v1864 = vmul.f32 %v707, %v1845
      %v1865 = vmul.f32 %v353, %v1845
      %v1866 = vmul.f32 %v444, %v1845
      %v1867 = vmul.f32 %v708, %v1845
      %v1868 = vmul.f32 %v355, %v1845
      %v1869 = vmul.f32 %v445, %v1845
      %v1870 = vmul.f32 %v709, %v1845
      %v1871 = vmul.f32 %v357, %v1845
      %v1872 = vmul.f32 %v446, %v1845
      %v1873 = vmul.f32 %v710, %v1845
      %v1874 = vmul.f32 %v359, %v1845
      %v1875 = vmul.f32 %v447, %v1845
      %v1876 = vmul.f32 %v711, %v1845
      %v1877 = vmul.f32 %v361, %v1845
      %v1878 = vmul.f32 %v448, %v1845
      %v1879 = vmul.f32 %v712, %v1845
      %v1880 = vmul.f32 %v363, %v1845
      %v1881 = vmul.f32 %v449, %v1845
      %v1882 = vmul.f32 %v713, %v1845
      %v1883 = vmul.f32 %v365, %v1845
      %v1884 = vmul.f32 %v450, %v1845
      %v1885 = vmul.f32 %v714, %v1845
      %v1886 = vmul.f32 %v367, %v1845
      %v1887 = vmul.f32 %v451, %v1845
      %v1888 = vmul.f32 %v1277, %v1845
      %v1889 = vmul.f32 %v961, %v1845
      %v1890 = vmul.f32 %v1032, %v1845
      %v1891 = vmul.f32 %v1841, %v1845
      %v1892 = vmul.f32 %v1525, %v1845
      %v1893 = vmul.f32 %v1594, %v1845
      %v1942 = vrot.slane %v1846, 2
      %v1943 = vrot.slane %v1847, 2
      %v1944 = vsel %vm815, %v1942, %v1943
      %v1945 = vrot.slane %v1848, 2
      %v1946 = vsel %vm815, %v1943, %v1945
      %v1947 = vrot.slane %v1849, 2
      %v1948 = vrot.slane %v1850, 2
      %v1949 = vsel %vm815, %v1947, %v1948
      %v1950 = vrot.slane %v1851, 2
      %v1951 = vsel %vm815, %v1948, %v1950
      %v1952 = vrot.slane %v1852, 2
      %v1953 = vrot.slane %v1853, 2
      %v1954 = vsel %vm815, %v1952, %v1953
      %v1955 = vrot.slane %v1854, 2
      %v1956 = vsel %vm815, %v1953, %v1955
      %v1957 = vrot.slane %v1855, 2
      %v1958 = vrot.slane %v1856, 2
      %v1959 = vsel %vm815, %v1957, %v1958
      %v1960 = vrot.slane %v1857, 2
      %v1961 = vsel %vm815, %v1958, %v1960
      %v1962 = vrot.slane %v1858, 2
      %v1963 = vrot.slane %v1859, 2
      %v1964 = vsel %vm815, %v1962, %v1963
      %v1965 = vrot.slane %v1860, 2
      %v1966 = vsel %vm815, %v1963, %v1965
      %v1967 = vrot.slane %v1861, 2
      %v1968 = vrot.slane %v1862, 2
      %v1969 = vsel %vm815, %v1967, %v1968
      %v1970 = vrot.slane %v1863, 2
      %v1971 = vsel %vm815, %v1968, %v1970
      %v1972 = vrot.slane %v1864, 2
      %v1973 = vrot.slane %v1865, 2
      %v1974 = vsel %vm815, %v1972, %v1973
      %v1975 = vrot.slane %v1866, 2
      %v1976 = vsel %vm815, %v1973, %v1975
      %v1977 = vrot.slane %v1867, 2
      %v1978 = vrot.slane %v1868, 2
      %v1979 = vsel %vm815, %v1977, %v1978
      %v1980 = vrot.slane %v1869, 2
      %v1981 = vsel %vm815, %v1978, %v1980
      %v1982 = vrot.slane %v1870, 2
      %v1983 = vrot.slane %v1871, 2
      %v1984 = vsel %vm815, %v1982, %v1983
      %v1985 = vrot.slane %v1872, 2
      %v1986 = vsel %vm815, %v1983, %v1985
      %v1987 = vrot.slane %v1873, 2
      %v1988 = vrot.slane %v1874, 2
      %v1989 = vsel %vm815, %v1987, %v1988
      %v1990 = vrot.slane %v1875, 2
      %v1991 = vsel %vm815, %v1988, %v1990
      %v1992 = vrot.slane %v1876, 2
      %v1993 = vrot.slane %v1877, 2
      %v1994 = vsel %vm815, %v1992, %v1993
      %v1995 = vrot.slane %v1878, 2
      %v1996 = vsel %vm815, %v1993, %v1995
      %v1997 = vrot.slane %v1879, 2
      %v1998 = vrot.slane %v1880, 2
      %v1999 = vsel %vm815, %v1997, %v1998
      %v2000 = vrot.slane %v1881, 2
      %v2001 = vsel %vm815, %v1998, %v2000
      %v2002 = vrot.slane %v1882, 2
      %v2003 = vrot.slane %v1883, 2
      %v2004 = vsel %vm815, %v2002, %v2003
      %v2005 = vrot.slane %v1884, 2
      %v2006 = vsel %vm815, %v2003, %v2005
      %v2007 = vrot.slane %v1885, 2
      %v2008 = vrot.slane %v1886, 2
      %v2009 = vsel %vm815, %v2007, %v2008
      %v2010 = vrot.slane %v1887, 2
      %v2011 = vsel %vm815, %v2008, %v2010
      %v2012 = vrot.slane %v1888, 2
      %v2013 = vrot.slane %v1889, 2
      %v2014 = vsel %vm815, %v2012, %v2013
      %v2015 = vrot.slane %v1890, 2
      %v2016 = vsel %vm815, %v2013, %v2015
      %v2017 = vrot.slane %v1891, 2
      %v2018 = vrot.slane %v1892, 2
      %v2019 = vsel %vm815, %v2017, %v2018
      %v2020 = vrot.slane %v1893, 2
      %v2021 = vsel %vm815, %v2018, %v2020
      %v2054 = vadd.f32 %v1807, %v1944
      %v2055 = vadd.f32 %v1808, %v1946
      %v2056 = vadd.f32 %v1809, %v1949
      %v2057 = vadd.f32 %v1810, %v1951
      %v2058 = vadd.f32 %v1811, %v1954
      %v2059 = vadd.f32 %v1812, %v1956
      %v2060 = vadd.f32 %v1813, %v1959
      %v2061 = vadd.f32 %v1814, %v1961
      %v2062 = vadd.f32 %v1815, %v1964
      %v2063 = vadd.f32 %v1816, %v1966
      %v2064 = vadd.f32 %v1817, %v1969
      %v2065 = vadd.f32 %v1818, %v1971
      %v2066 = vadd.f32 %v1819, %v1974
      %v2067 = vadd.f32 %v1820, %v1976
      %v2068 = vadd.f32 %v1821, %v1979
      %v2069 = vadd.f32 %v1822, %v1981
      %v2070 = vadd.f32 %v1823, %v1984
      %v2071 = vadd.f32 %v1824, %v1986
      %v2072 = vadd.f32 %v1825, %v1989
      %v2073 = vadd.f32 %v1826, %v1991
      %v2074 = vadd.f32 %v1827, %v1994
      %v2075 = vadd.f32 %v1828, %v1996
      %v2076 = vadd.f32 %v1829, %v1999
      %v2077 = vadd.f32 %v1830, %v2001
      %v2078 = vadd.f32 %v1831, %v2004
      %v2079 = vadd.f32 %v1832, %v2006
      %v2080 = vadd.f32 %v1833, %v2009
      %v2081 = vadd.f32 %v1834, %v2011
      %v2082 = vadd.f32 %v1835, %v2014
      %v2083 = vadd.f32 %v1836, %v2016
      %v2084 = vadd.f32 %v1837, %v2019
      %v2085 = vadd.f32 %v1838, %v2021
      %v2086 = vld [vmem:[%s2] sm:$0x1]
      %v2088 = vlaneseq
      %v2089 = vshrl.u32 %v2088, 7
      %v2090 = vsub.s32 0, %v2089
      %v2091 = vrot.slane %v2086, %v2090
      %v2093 = vadd.f32 %v2054, %v2091
      %v2094 = vadd.f32 %v2055, %v2091
      %v2095 = vadd.f32 %v2056, %v2091
      %v2096 = vadd.f32 %v2057, %v2091
      %v2097 = vadd.f32 %v2058, %v2091
      %v2098 = vadd.f32 %v2059, %v2091
      %v2099 = vadd.f32 %v2060, %v2091
      %v2100 = vadd.f32 %v2061, %v2091
      %v2101 = vadd.f32 %v2062, %v2091
      %v2102 = vadd.f32 %v2063, %v2091
      %v2103 = vadd.f32 %v2064, %v2091
      %v2104 = vadd.f32 %v2065, %v2091
      %v2105 = vadd.f32 %v2066, %v2091
      %v2106 = vadd.f32 %v2067, %v2091
      %v2107 = vadd.f32 %v2068, %v2091
      %v2108 = vadd.f32 %v2069, %v2091
      %v2109 = vadd.f32 %v2070, %v2091
      %v2110 = vadd.f32 %v2071, %v2091
      %v2111 = vadd.f32 %v2072, %v2091
      %v2112 = vadd.f32 %v2073, %v2091
      %v2113 = vadd.f32 %v2074, %v2091
      %v2114 = vadd.f32 %v2075, %v2091
      %v2115 = vadd.f32 %v2076, %v2091
      %v2116 = vadd.f32 %v2077, %v2091
      %v2117 = vadd.f32 %v2078, %v2091
      %v2118 = vadd.f32 %v2079, %v2091
      %v2119 = vadd.f32 %v2080, %v2091
      %v2120 = vadd.f32 %v2081, %v2091
      %v2121 = vadd.f32 %v2082, %v2091
      %v2122 = vadd.f32 %v2083, %v2091
      %v2123 = vadd.f32 %v2084, %v2091
      %v2124 = vadd.f32 %v2085, %v2091
      %v2125 = vpack.c.bf16 %v2094, %v2093
      %v2126 = vpack.c.bf16 %v2096, %v2095
      %v2127 = vpack.c.bf16 %v2098, %v2097
      %v2128 = vpack.c.bf16 %v2100, %v2099
      %v2129 = vpack.c.bf16 %v2102, %v2101
      %v2130 = vpack.c.bf16 %v2104, %v2103
      %v2131 = vpack.c.bf16 %v2106, %v2105
      %v2132 = vpack.c.bf16 %v2108, %v2107
      %v2133 = vpack.c.bf16 %v2110, %v2109
      %v2134 = vpack.c.bf16 %v2112, %v2111
      %v2135 = vpack.c.bf16 %v2114, %v2113
      %v2136 = vpack.c.bf16 %v2116, %v2115
      %v2137 = vpack.c.bf16 %v2118, %v2117
      %v2138 = vpack.c.bf16 %v2120, %v2119
      %v2139 = vpack.c.bf16 %v2122, %v2121
      %v2140 = vpack.c.bf16 %v2124, %v2123
      %v2141 = vld [vmem:[%s3] sm:$0xf]
      %v2142 = vld [vmem:[%s3 + $0x4] sm:$0xf]
      %v2143 = vld [vmem:[%s3 + $0x8] sm:$0xf]
      %v2144 = vld [vmem:[%s3 + $0xc] sm:$0xf]
      %v2145 = vld [vmem:[%s3 + $0x10] sm:$0xf]
      %v2146 = vld [vmem:[%s3 + $0x14] sm:$0xf]
      %v2147 = vld [vmem:[%s3 + $0x18] sm:$0xf]
      %v2148 = vld [vmem:[%s3 + $0x1c] sm:$0xf]
      %v2149 = vld [vmem:[%s3 + $0x20] sm:$0xf]
      %v2150 = vld [vmem:[%s3 + $0x24] sm:$0xf]
      %v2151 = vld [vmem:[%s3 + $0x28] sm:$0xf]
      %v2152 = vld [vmem:[%s3 + $0x2c] sm:$0xf]
      %v2153 = vld [vmem:[%s3 + $0x30] sm:$0xf]
      %v2154 = vld [vmem:[%s3 + $0x34] sm:$0xf]
      %v2155 = vld [vmem:[%s3 + $0x38] sm:$0xf]
      %v2156 = vld [vmem:[%s3 + $0x3c] sm:$0xf]
      %v2157 = vld [vmem:[%s4] sm:$0x1]
      %v2159 = vlaneseq
      %v2160 = vshrl.u32 %v2159, 7
      %v2161 = vsub.s32 0, %v2160
      %v2162 = vrot.slane %v2157, %v2161
      %v2180 = vunpack.c.l.b16 %v2141
      %v2181 = vunpack.c.l.b16 %v2142
      %v2182 = vunpack.c.l.b16 %v2143
      %v2183 = vunpack.c.l.b16 %v2144
      %v2184 = vunpack.c.l.b16 %v2145
      %v2185 = vunpack.c.l.b16 %v2146
      %v2186 = vunpack.c.l.b16 %v2147
      %v2187 = vunpack.c.l.b16 %v2148
      %v2188 = vunpack.c.l.b16 %v2149
      %v2189 = vunpack.c.l.b16 %v2150
      %v2190 = vunpack.c.l.b16 %v2151
      %v2191 = vunpack.c.l.b16 %v2152
      %v2192 = vunpack.c.l.b16 %v2153
      %v2193 = vunpack.c.l.b16 %v2154
      %v2194 = vunpack.c.l.b16 %v2155
      %v2195 = vunpack.c.l.b16 %v2156
      %v2196 = vpack.c.b16 %v2181, %v2180
      %v2197 = vpack.c.b16 %v2183, %v2182
      %v2198 = vpack.c.b16 %v2185, %v2184
      %v2199 = vpack.c.b16 %v2187, %v2186
      %v2200 = vpack.c.b16 %v2189, %v2188
      %v2201 = vpack.c.b16 %v2191, %v2190
      %v2202 = vpack.c.b16 %v2193, %v2192
      %v2203 = vpack.c.b16 %v2195, %v2194
      %2212 = vmatprep.subr.bf16.mxu0 0
      %2213 = vmatpush1.bf16.msra.mxu0 %v2196
      %2214 = vmatprep.subr.bf16.mxu0 0
      %2215 = vmatpush1.bf16.msra.mxu0 %v2197
      %2216 = vmatprep.subr.bf16.mxu0 0
      %2217 = vmatpush1.bf16.msra.mxu0 %v2198
      %2218 = vmatprep.subr.bf16.mxu0 0
      %2219 = vmatpush1.bf16.msra.mxu0 %v2199
      %2220 = vmatprep.subr.bf16.mxu0 0
      %2221 = vmatpush1.bf16.msra.mxu0 %v2200
      %2222 = vmatprep.subr.bf16.mxu0 0
      %2223 = vmatpush1.bf16.msra.mxu0 %v2201
      %2224 = vmatprep.subr.bf16.mxu0 0
      %2225 = vmatpush1.bf16.msra.mxu0 %v2202
      %2226 = vmatprep.subr.bf16.mxu0 0
      %2227 = vmatpush1.bf16.msra.mxu0 %v2203
      %2228 = vmatprep.subr.bf16.mxu0 0
      %2229 = vmatpush1.bf16.msra.mxu0 0
      %2230 = vmatprep.subr.bf16.mxu0 0
      %2231 = vmatpush1.bf16.msra.mxu0 0
      %2232 = vmatprep.subr.bf16.mxu0 0
      %2233 = vmatpush1.bf16.msra.mxu0 0
      %2234 = vmatprep.subr.bf16.mxu0 0
      %2235 = vmatpush1.bf16.msra.mxu0 0
      %2236 = vmatprep.subr.bf16.mxu0 0
      %2237 = vmatpush1.bf16.msra.mxu0 0
      %2238 = vmatprep.subr.bf16.mxu0 0
      %2239 = vmatpush1.bf16.msra.mxu0 0
      %2240 = vmatprep.subr.bf16.mxu0 0
      %2241 = vmatpush1.bf16.msra.mxu0 0
      %2242 = vmatprep.subr.bf16.mxu0 0
      %2243 = vmatpush1.bf16.msra.mxu0 0
      %2244 = vmatprep.mubr.bf16.mxu0 0
      %2245 = vmatmul.mubr.bf16.gmra.mrb[0].mxu0 %v2125
      %v2246 = vpop.f32.mrb[0].mxu0
      %v2247 = vadd.f32 %v2162, %v2246
      %v2248 = vpop.f32.mrb[0].mxu0
      %v2249 = vpop.f32.mrb[0].mxu0
      %v2250 = vadd.f32 %v2162, %v2249
      %v2251 = vpop.f32.mrb[0].mxu0
      %2252 = vmatprep.mubr.bf16.mxu0 0
      %2253 = vmatmul.mubr.bf16.gmra.mrb[0].mxu0 %v2126
      %v2254 = vpop.f32.mrb[0].mxu0
      %v2255 = vadd.f32 %v2162, %v2254
      %v2256 = vpop.f32.mrb[0].mxu0
      %v2257 = vpop.f32.mrb[0].mxu0
      %v2258 = vadd.f32 %v2162, %v2257
      %v2259 = vpop.f32.mrb[0].mxu0
      %2260 = vmatprep.mubr.bf16.mxu0 0
      %2261 = vmatmul.mubr.bf16.gmra.mrb[0].mxu0 %v2127
      %v2262 = vpop.f32.mrb[0].mxu0
      %v2263 = vadd.f32 %v2162, %v2262
      %v2264 = vpop.f32.mrb[0].mxu0
      %v2265 = vpop.f32.mrb[0].mxu0
      %v2266 = vadd.f32 %v2162, %v2265
      %v2267 = vpop.f32.mrb[0].mxu0
      %2268 = vmatprep.mubr.bf16.mxu0 0
      %2269 = vmatmul.mubr.bf16.gmra.mrb[0].mxu0 %v2128
      %v2270 = vpop.f32.mrb[0].mxu0
      %v2271 = vadd.f32 %v2162, %v2270
      %v2272 = vpop.f32.mrb[0].mxu0
      %v2273 = vpop.f32.mrb[0].mxu0
      %v2274 = vadd.f32 %v2162, %v2273
      %v2275 = vpop.f32.mrb[0].mxu0
      %2276 = vmatprep.mubr.bf16.mxu0 0
      %2277 = vmatmul.mubr.bf16.gmra.mrb[0].mxu0 %v2129
      %v2278 = vpop.f32.mrb[0].mxu0
      %v2279 = vadd.f32 %v2162, %v2278
      %v2280 = vpop.f32.mrb[0].mxu0
      %v2281 = vpop.f32.mrb[0].mxu0
      %v2282 = vadd.f32 %v2162, %v2281
      %v2283 = vpop.f32.mrb[0].mxu0
      %2284 = vmatprep.mubr.bf16.mxu0 0
      %2285 = vmatmul.mubr.bf16.gmra.mrb[0].mxu0 %v2130
      %v2286 = vpop.f32.mrb[0].mxu0
      %v2287 = vadd.f32 %v2162, %v2286
      %v2288 = vpop.f32.mrb[0].mxu0
      %v2289 = vpop.f32.mrb[0].mxu0
      %v2290 = vadd.f32 %v2162, %v2289
      %v2291 = vpop.f32.mrb[0].mxu0
      %2292 = vmatprep.mubr.bf16.mxu0 0
      %2293 = vmatmul.mubr.bf16.gmra.mrb[0].mxu0 %v2131
      %v2294 = vpop.f32.mrb[0].mxu0
      %v2295 = vadd.f32 %v2162, %v2294
      %v2296 = vpop.f32.mrb[0].mxu0
      %v2297 = vpop.f32.mrb[0].mxu0
      %v2298 = vadd.f32 %v2162, %v2297
      %v2299 = vpop.f32.mrb[0].mxu0
      %2300 = vmatprep.mubr.bf16.mxu0 0
      %2301 = vmatmul.mubr.bf16.gmra.mrb[0].mxu0 %v2132
      %v2302 = vpop.f32.mrb[0].mxu0
      %v2303 = vadd.f32 %v2162, %v2302
      %v2304 = vpop.f32.mrb[0].mxu0
      %v2305 = vpop.f32.mrb[0].mxu0
      %v2306 = vadd.f32 %v2162, %v2305
      %v2307 = vpop.f32.mrb[0].mxu0
      %2308 = vmatprep.mubr.bf16.mxu0 0
      %2309 = vmatmul.mubr.bf16.gmra.mrb[0].mxu0 %v2133
      %v2310 = vpop.f32.mrb[0].mxu0
      %v2311 = vadd.f32 %v2162, %v2310
      %v2312 = vpop.f32.mrb[0].mxu0
      %v2313 = vpop.f32.mrb[0].mxu0
      %v2314 = vadd.f32 %v2162, %v2313
      %v2315 = vpop.f32.mrb[0].mxu0
      %2316 = vmatprep.mubr.bf16.mxu0 0
      %2317 = vmatmul.mubr.bf16.gmra.mrb[0].mxu0 %v2134
      %v2318 = vpop.f32.mrb[0].mxu0
      %v2319 = vadd.f32 %v2162, %v2318
      %v2320 = vpop.f32.mrb[0].mxu0
      %v2321 = vpop.f32.mrb[0].mxu0
      %v2322 = vadd.f32 %v2162, %v2321
      %v2323 = vpop.f32.mrb[0].mxu0
      %2324 = vmatprep.mubr.bf16.mxu0 0
      %2325 = vmatmul.mubr.bf16.gmra.mrb[0].mxu0 %v2135
      %v2326 = vpop.f32.mrb[0].mxu0
      %v2327 = vadd.f32 %v2162, %v2326
      %v2328 = vpop.f32.mrb[0].mxu0
      %v2329 = vpop.f32.mrb[0].mxu0
      %v2330 = vadd.f32 %v2162, %v2329
      %v2331 = vpop.f32.mrb[0].mxu0
      %2332 = vmatprep.mubr.bf16.mxu0 0
      %2333 = vmatmul.mubr.bf16.gmra.mrb[0].mxu0 %v2136
      %v2334 = vpop.f32.mrb[0].mxu0
      %v2335 = vadd.f32 %v2162, %v2334
      %v2336 = vpop.f32.mrb[0].mxu0
      %v2337 = vpop.f32.mrb[0].mxu0
      %v2338 = vadd.f32 %v2162, %v2337
      %v2339 = vpop.f32.mrb[0].mxu0
      %2340 = vmatprep.mubr.bf16.mxu0 0
      %2341 = vmatmul.mubr.bf16.gmra.mrb[0].mxu0 %v2137
      %v2342 = vpop.f32.mrb[0].mxu0
      %v2343 = vadd.f32 %v2162, %v2342
      %v2344 = vpop.f32.mrb[0].mxu0
      %v2345 = vpop.f32.mrb[0].mxu0
      %v2346 = vadd.f32 %v2162, %v2345
      %v2347 = vpop.f32.mrb[0].mxu0
      %2348 = vmatprep.mubr.bf16.mxu0 0
      %2349 = vmatmul.mubr.bf16.gmra.mrb[0].mxu0 %v2138
      %v2350 = vpop.f32.mrb[0].mxu0
      %v2351 = vadd.f32 %v2162, %v2350
      %v2352 = vpop.f32.mrb[0].mxu0
      %v2353 = vpop.f32.mrb[0].mxu0
      %v2354 = vadd.f32 %v2162, %v2353
      %v2355 = vpop.f32.mrb[0].mxu0
      %2356 = vmatprep.mubr.bf16.mxu0 0
      %2357 = vmatmul.mubr.bf16.gmra.mrb[0].mxu0 %v2139
      %v2358 = vpop.f32.mrb[0].mxu0
      %v2359 = vadd.f32 %v2162, %v2358
      %v2360 = vpop.f32.mrb[0].mxu0
      %v2361 = vpop.f32.mrb[0].mxu0
      %v2362 = vadd.f32 %v2162, %v2361
      %v2363 = vpop.f32.mrb[0].mxu0
      %2364 = vmatprep.mubr.bf16.mxu0 0
      %2365 = vmatmul.mubr.bf16.gmra.mrb[0].mxu0 %v2140
      %v2366 = vpop.f32.mrb[0].mxu0
      %v2367 = vadd.f32 %v2162, %v2366
      %v2368 = vpop.f32.mrb[0].mxu0
      %v2369 = vpop.f32.mrb[0].mxu0
      %v2370 = vadd.f32 %v2162, %v2369
      %v2371 = vpop.f32.mrb[0].mxu0
      %2372 = vdwg.mxu0
      %2373 = vst [vmem:[%s260] sm:$0xff] %v2247
      %2374 = vst [vmem:[%s260 + $0x8] sm:$0xff] %v2250
      %2375 = vst [vmem:[%s260 + $0x10] sm:$0xff] %v2255
      %2376 = vst [vmem:[%s260 + $0x18] sm:$0xff] %v2258
      %2377 = vst [vmem:[%s260 + $0x20] sm:$0xff] %v2263
      %2378 = vst [vmem:[%s260 + $0x28] sm:$0xff] %v2266
      %2379 = vst [vmem:[%s260 + $0x30] sm:$0xff] %v2271
      %2380 = vst [vmem:[%s260 + $0x38] sm:$0xff] %v2274
      %2381 = vst [vmem:[%s260 + $0x40] sm:$0xff] %v2279
      %2382 = vst [vmem:[%s260 + $0x48] sm:$0xff] %v2282
      %2383 = vst [vmem:[%s260 + $0x50] sm:$0xff] %v2287
      %2384 = vst [vmem:[%s260 + $0x58] sm:$0xff] %v2290
      %2385 = vst [vmem:[%s260 + $0x60] sm:$0xff] %v2295
      %2386 = vst [vmem:[%s260 + $0x68] sm:$0xff] %v2298
      %2387 = vst [vmem:[%s260 + $0x70] sm:$0xff] %v2303
      %2388 = vst [vmem:[%s260 + $0x78] sm:$0xff] %v2306
      %2389 = vst [vmem:[%s260 + $0x80] sm:$0xff] %v2311
      %2390 = vst [vmem:[%s260 + $0x88] sm:$0xff] %v2314
      %2391 = vst [vmem:[%s260 + $0x90] sm:$0xff] %v2319
      %2392 = vst [vmem:[%s260 + $0x98] sm:$0xff] %v2322
      %2393 = vst [vmem:[%s260 + $0xa0] sm:$0xff] %v2327
      %2394 = vst [vmem:[%s260 + $0xa8] sm:$0xff] %v2330
      %2395 = vst [vmem:[%s260 + $0xb0] sm:$0xff] %v2335
      %2396 = vst [vmem:[%s260 + $0xb8] sm:$0xff] %v2338
      %2397 = vst [vmem:[%s260 + $0xc0] sm:$0xff] %v2343
      %2398 = vst [vmem:[%s260 + $0xc8] sm:$0xff] %v2346
      %2399 = vst [vmem:[%s260 + $0xd0] sm:$0xff] %v2351
      %2400 = vst [vmem:[%s260 + $0xd8] sm:$0xff] %v2354
      %2401 = vst [vmem:[%s260 + $0xe0] sm:$0xff] %v2359
      %2402 = vst [vmem:[%s260 + $0xe8] sm:$0xff] %v2362
      %2403 = vst [vmem:[%s260 + $0xf0] sm:$0xff] %v2367
      %2404 = vst [vmem:[%s260 + $0xf8] sm:$0xff] %v2370
      %p2405 = scmp.lt.s32.totalorder %s20, 1
      %s2406 = scalar_select %p2405, %s20, 1
      %p2407 = scmp.lt.s32.totalorder %s21, 0
      %s2408 = scalar_select %p2407, %s21, 0
      %s2409 = smul.addr %s2408, 32
      %s2410 = smul.addr %s2406, 32
      %s2411 = sadd.s32 %s2409, %s2410
      %s2412 = smul.addr %s2411, 8
      %s2413 = scalar_lea.vmem %s5, %s2412
      // Predicated region
      $region41: #{separable_conv2d_forward.1} parent=39 // pred_check
        %p2414 = pneg %p160
      $region42: #{separable_conv2d_forward.1} parent=39 // pred_check_branch
        %2416 = sbr.rel (%p2414) target = $region44
      $region43: #{separable_conv2d_forward.1} parent=39 // pred_region
        _
      $region44: #{separable_conv2d_forward.1} parent=39 // pred_fallthru
        _
    $region40: #{separable_conv2d_forward.1} parent=5 // pred_fallthru
      _
    %p2417 = scmp.le.s32.totalorder 2, %s11
    // Predicated region
    $region45: #{separable_conv2d_forward.1} parent=5 // pred_check
      %p2418 = pneg %p2417
    $region46: #{separable_conv2d_forward.1} parent=5 // pred_check_branch
      %2420 = sbr.rel (%p2418) target = $region48
    $region47: #{separable_conv2d_forward.1} parent=5 // pred_region
      %s2421 = ssub.s32 %s11, 2
      // Predicated region
      $region49: #{separable_conv2d_forward.1} parent=47 // pred_check
        %p2422 = pneg %p166
      $region50: #{separable_conv2d_forward.1} parent=47 // pred_check_branch
        %2424 = sbr.rel (%p2422) target = $region52
      $region51: #{separable_conv2d_forward.1} parent=47 // pred_region
        %p2425 = scmp.lt.s32.totalorder %s22, 1
        %s2426 = scalar_select %p2425, %s22, 1
        %p2427 = scmp.lt.s32.totalorder %s23, 0
        %s2428 = scalar_select %p2427, %s23, 0
        %s2429 = smul.addr %s2428, 32
        %s2430 = smul.addr %s2426, 32
        %s2431 = sadd.s32 %s2429, %s2430
        %s2432 = smul.addr %s2431, 8
        %s2433 = scalar_lea.vmem %s5, %s2432
      $region52: #{separable_conv2d_forward.1} parent=47 // pred_fallthru
        _
    $region48: #{separable_conv2d_forward.1} parent=5 // pred_fallthru
      _
  $region6: #{separable_conv2d_forward.1} parent=0 // loop_footer
    %s15 = sadd.s32 1, %s11
  $region7: #{separable_conv2d_forward.1} parent=0 // loop_footer_branch
    %10 = sbr.rel target = $region3
  $region8: #{separable_conv2d_forward.1} parent=0 // loop_exit
    _

</llo_original>
